<compile_context>
chip_gen: v7x
topology: tpu7x:2x2x1
jax: 0.10.0
libtpu: 0.0.40
codegen_flags: <defaults>
</compile_context>

<pallas_src>
import functools

import jax
import jax.numpy as jnp
from jax.experimental import pallas as pl
from jax.experimental.pallas import tpu as pltpu

# Classic RK4 Butcher tableau (matches BUTCHER_TABLEAU["RK4"] in GNRK):
#   rows 0..order-1 : stage coefficients, last row : combination weights.
RK4_TABLEAU = [
    [],                    # k1 : intermediate = 0
    [0.5],                 # k2 : 0.5 * k1
    [0.0, 0.5],            # k3 : 0.5 * k2
    [0.0, 0.0, 1.0],       # k4 : 1.0 * k3
    [1.0, 2.0, 2.0, 1.0],  # combine, divided by sum (= 6)
]


def _rk_kernel(tableau,
               x_ref, dt_ref, nag_ref, adj_ref,
               w1y_ref, w1a_ref, wng_ref, b1_ref, w2_ref, b2_ref,
               out_ref):
    """One grid step = full RK integration for one super-block of G graphs (GN rows)."""
    rows, S = x_ref.shape
    x = x_ref[...]                                   # (GN, S)      f32
    dt = jnp.broadcast_to(dt_ref[...], (rows, S))    # hoisted broadcast (reused by all stages)
    adj = adj_ref[0]                                 # (GN, GN)     bf16, block-diagonal
    w1y = w1y_ref[...]                               # (S, H)       bf16
    w1a = w1a_ref[...]                               # (S, H)       bf16
    wng = wng_ref[...]                               # (Fn+Fg, H)   bf16
    b1 = b1_ref[...]                                 # (1, H)       f32
    w2 = w2_ref[...]                                 # (H, S)       bf16
    b2 = b2_ref[...]                                 # (1, S)       f32

    # Node/glob attribute contribution is identical for every RK stage -> hoist (bf16 MXU).
    nag_bf = nag_ref[...].astype(jnp.bfloat16)
    static_h = jnp.dot(nag_bf, wng, preferred_element_type=jnp.float32) + b1

    def approx(y):
        # Dense block-diagonal aggregation over the whole super-block (one MXU push).
        y_bf = y.astype(jnp.bfloat16)
        agg = jnp.dot(adj, y_bf, preferred_element_type=jnp.float32)
        # Two small MXU pushes instead of a lane-axis concat + fused dot.
        h = jnp.tanh(jnp.dot(y_bf, w1y, preferred_element_type=jnp.float32)
                     + jnp.dot(agg.astype(jnp.bfloat16), w1a,
                               preferred_element_type=jnp.float32)
                     + static_h)
        return jnp.dot(h.astype(jnp.bfloat16), w2,
                       preferred_element_type=jnp.float32) + b2

    order = len(tableau) - 1
    final = tableau[-1]
    inv_sum = 1.0 / float(sum(final))                 # reciprocal folded at trace time

    # Stage liveness: k_i stays live only until its last consuming stage; the final
    # Butcher combination is folded into `acc` on the fly.
    last_use = {}
    for j in range(1, order):
        for idx, c in enumerate(tableau[j]):
            if c != 0.0:
                last_use[idx] = j

    live = {}
    acc = None
    for i, coeffs in enumerate(tableau[:-1]):
        inter = None
        for idx, c in enumerate(coeffs):
            if c == 0.0:
                continue
            term = live[idx] if c == 1.0 else c * live[idx]
            inter = term if inter is None else inter + term
        # Drop stages whose last consumer is this stage.
        for idx in [k for k, lu in last_use.items() if lu == i and k in live]:
            del live[idx]
        y = x if inter is None else x + inter * dt
        k = approx(y)
        cf = final[i] if i < len(final) else 0.0
        if cf != 0.0:
            term = k if cf == 1.0 else cf * k
            acc = term if acc is None else acc + term
        if i in last_use:
            live[i] = k

    if acc is None:
        acc = jnp.zeros((rows, S), jnp.float32)
    out_ref[...] = (acc * inv_sum).astype(out_ref.dtype)


def _pick_super_batch(B, N, target_rows):
    """Largest divisor G of B with G*N <= target_rows; keep grid length >= 2 if possible."""
    divisors = [d for d in range(1, B + 1) if B % d == 0]
    cand = [d for d in divisors if d * N <= target_rows] or [1]
    G = max(cand)
    if B // G < 2:
        cand2 = [d for d in cand if B // d >= 2]
        if cand2:
            G = max(cand2)   # leave >= 2 grid steps so v7x's two TCs both get work
    return G


def runge_kutta_forward(x, edge_index, batch, dt, node_attr, edge_attr,
                        glob_attr, params, tableau=RK4_TABLEAU, target_rows=256):
    """JAX wrapper: graph glue (gather / block-diagonal adjacency) + one Pallas call."""
    BN, S = x.shape
    B = glob_attr.shape[0]
    # TODO(synk): assumes every graph has the same node count with contiguous node ids
    #             (true for the GNRK batching); ragged graphs need padding.
    N = BN // B
    Fn = node_attr.shape[1]
    Fg = glob_attr.shape[1]

    G = _pick_super_batch(B, N, target_rows)
    GN = G * N
    n_super = B // G

    # --- glue (plain JAX): per-node global attrs + block-diagonal adjacency ---
    glob_node = glob_attr[batch]                                    # (BN, Fg)
    nag = jnp.concatenate([node_attr, glob_node], axis=-1).astype(jnp.float32)

    src, dst = edge_index[0], edge_index[1]
    edge_w = edge_attr.mean(axis=-1).astype(jnp.float32)            # (BE,)
    # Cross-graph edges are invalid in GNRK batching; drop them (jit-safe mask).
    edge_w = jnp.where((src // N) == (dst // N), edge_w, 0.0)

    sb = src // GN                                                   # super-block of each edge
    adj = (jnp.zeros((n_super, GN, GN), jnp.float32)
           .at[sb, dst - sb * GN, src - sb * GN]
           .add(edge_w)).astype(jnp.bfloat16)                        # MXU operand

    w1y, w1a, w1n, w1g, b1, w2, b2 = params
    H = w1y.shape[1]
    wng_cat = jnp.concatenate([w1n, w1g], axis=0).astype(jnp.bfloat16)   # (Fn+Fg, H)

    inputs = (x.astype(jnp.float32), dt.astype(jnp.float32), nag, adj,
              w1y.astype(jnp.bfloat16), w1a.astype(jnp.bfloat16), wng_cat,
              b1.astype(jnp.float32), w2.astype(jnp.bfloat16), b2.astype(jnp.float32))

    n_stages = len(tableau) - 1
    flops_per_sb = (2 * GN * (Fn + Fg) * H                          # static_h
                    + n_stages * (2 * GN * GN * S                   # adj @ y
                                  + 2 * GN * S * H * 2              # y@W1y + agg@W1a
                                  + 2 * GN * H * S))                 # h @ W2
    cost = pl.CostEstimate(
        flops=n_super * flops_per_sb,
        transcendentals=n_super * n_stages * GN * H,
        bytes_accessed=int(sum(a.size * a.dtype.itemsize for a in inputs)
                           + BN * S * 4),
    )

    # Estimate per-call VMEM footprint: 2x (double-buffered) streamed blocks + weights
    # + f32 intermediates. Only raise the scoped limit when the default would bind.
    stream_bytes = GN * S * 4 + GN * 4 + GN * (Fn + Fg) * 4 + GN * GN * 2 + GN * S * 4
    weight_bytes = (2 * S + Fn + Fg) * H * 2 + H * S * 2 + (H + S) * 4
    interm_bytes = 6 * GN * max(H, S) * 4
    est_vmem = 2 * stream_bytes + 2 * weight_bytes + interm_bytes
    vmem_limit = None
    if est_vmem > 12 * 2 ** 20:
        vmem_limit = int(min(max(2 * est_vmem, 32 * 2 ** 20), 48 * 2 ** 20))  # v7x-safe cap

    kernel = functools.partial(_rk_kernel, tableau)

    # Weights stay VMEM-resident (index_map -> (0, 0) for every super-block); node
    # tensors and adj are streamed per super-block and pipelined by BlockSpec.
    resident = lambda shape: pl.BlockSpec(shape, lambda g: (0,) * len(shape))

    return pl.pallas_call(
        kernel,
        out_shape=jax.ShapeDtypeStruct((BN, S), jnp.float32),
        grid_spec=pltpu.PrefetchScalarGridSpec(
            num_scalar_prefetch=0,
            grid=(n_super,),
            in_specs=[
                pl.BlockSpec((GN, S), lambda g: (g, 0)),             # x
                pl.BlockSpec((GN, 1), lambda g: (g, 0)),             # dt
                pl.BlockSpec((GN, Fn + Fg), lambda g: (g, 0)),       # nag
                pl.BlockSpec((1, GN, GN), lambda g: (g, 0, 0)),      # adj (per super-block)
                resident((S, H)),                                    # W1y
                resident((S, H)),                                    # W1a
                resident((Fn + Fg, H)),                              # Wng
                resident((1, H)),                                    # b1
                resident((H, S)),                                    # W2
                resident((1, S)),                                    # b2
            ],
            out_specs=pl.BlockSpec((GN, S), lambda g: (g, 0)),
        ),
        compiler_params=pltpu.CompilerParams(
            dimension_semantics=("parallel",),                       # megacore on v7x
            vmem_limit_bytes=vmem_limit),
        cost_estimate=cost,
    )(*inputs)


def _reference(x, dt, nag, adj, w1y, w1a, wng, b1, w2, b2, tableau):
    """Pure-JAX f32 reference of the same forward (for correctness check)."""
    B, N, _ = adj.shape
    S = x.shape[-1]
    xb = x.reshape(B, N, S)
    dtb = dt.reshape(B, N, 1)
    nagb = nag.reshape(B, N, -1)
    static_h = nagb @ wng + b1

    def approx(y):
        agg = jnp.einsum("bij,bjs->bis", adj, y)
        h = jnp.tanh(y @ w1y + agg @ w1a + static_h)
        return h @ w2 + b2

    states = []
    for coeffs in tableau[:-1]:
        inter = jnp.zeros_like(xb)
        for c, s in zip(coeffs, states):
            inter = inter + c * s
        states.append(approx(xb + inter * dtb))
    final = tableau[-1]
    acc = sum(c * s for c, s in zip(final, states))
    return (acc / sum(final)).reshape(B * N, S)


def make_params(key, state_dim, node_dim, glob_dim, hidden):
    k = jax.random.split(key, 7)
    s = 0.1
    w1y = s * jax.random.normal(k[0], (state_dim, hidden), jnp.float32)
    w1a = s * jax.random.normal(k[1], (state_dim, hidden), jnp.float32)
    w1n = s * jax.random.normal(k[2], (node_dim, hidden), jnp.float32)
    w1g = s * jax.random.normal(k[3], (glob_dim, hidden), jnp.float32)
    b1 = s * jax.random.normal(k[4], (1, hidden), jnp.float32)
    w2 = s * jax.random.normal(k[5], (hidden, state_dim), jnp.float32)
    b2 = s * jax.random.normal(k[6], (1, state_dim), jnp.float32)
    return (w1y, w1a, w1n, w1g, b1, w2, b2)


if __name__ == "__main__":
    # Small shapes consistent with the module's forward signature.
    B = 4            # graphs in batch  (-> super-blocks of G=2 graphs, grid of 2)
    N = 8            # nodes per graph (multiple of 8 -> sublane aligned)
    BN = B * N       # 32 total nodes
    S = 4            # state_feature
    Fn = 4           # node_feature
    Fe = 3           # edge_feature
    Fg = 2           # glob_feature
    H = 128          # approximator hidden width (lane-dense: full 128 lanes)

    key = jax.random.PRNGKey(0)
    kx, kdt, kna, kea, kga, kp = jax.random.split(key, 6)

    x = jax.random.normal(kx, (BN, S), jnp.float32)
    dt = 0.01 * jnp.ones((BN, 1), jnp.float32)
    node_attr = jax.random.normal(kna, (BN, Fn), jnp.float32)
    glob_attr = jax.random.normal(kga, (B, Fg), jnp.float32)
    batch = jnp.repeat(jnp.arange(B, dtype=jnp.int32), N)           # (BN,)

    # Ring graph inside each batch element (bidirectional): BE = 2 * BN.
    intra_src = jnp.arange(N, dtype=jnp.int32)
    intra_dst = (intra_src + 1) % N
    srcs, dsts = [], []
    for b in range(B):
        off = b * N
        srcs += [intra_src + off, intra_dst + off]
        dsts += [intra_dst + off, intra_src + off]
    edge_index = jnp.stack([jnp.concatenate(srcs), jnp.concatenate(dsts)], 0)   # (2, BE)
    BE = edge_index.shape[1]
    edge_attr = jax.random.normal(kea, (BE, Fe), jnp.float32)

    params = make_params(kp, S, Fn, Fg, H)

    out = runge_kutta_forward(x, edge_index, batch, dt, node_attr, edge_attr,
                              glob_attr, params)
    out = jax.block_until_ready(out)

    # Pure-JAX f32 reference (bf16 MXU operands in the kernel -> loose tolerance).
    w1y, w1a, w1n, w1g, b1, w2, b2 = params
    glob_node = glob_attr[batch]
    nag = jnp.concatenate([node_attr, glob_node], axis=-1)
    src, dst = edge_index[0], edge_index[1]
    edge_w = edge_attr.mean(axis=-1)
    g_of_edge = src // N
    adj_f32 = (jnp.zeros((B, N, N), jnp.float32)
               .at[g_of_edge, dst - g_of_edge * N, src - g_of_edge * N]
               .add(edge_w))
    ref = _reference(x, dt, nag, adj_f32, w1y, w1a,
                     jnp.concatenate([w1n, w1g], 0), b1, w2, b2, RK4_TABLEAU)

    assert out.shape == (BN, S), out.shape
    assert bool(jnp.all(jnp.isfinite(out)))
    assert bool(jnp.allclose(out, ref, rtol=5e-2, atol=5e-2)), \
        float(jnp.max(jnp.abs(out - ref)))
    print("KERNEL_OK")
</pallas_src>

<mosaic_0001>
module attributes {stable_mosaic.version = 11 : i64} {
  func.func @_rk_kernel(%arg0: i32, %arg1: memref<16x4xf32, #tpu.memory_space<vmem>>, %arg2: memref<16x1xf32, #tpu.memory_space<vmem>>, %arg3: memref<16x6xf32, #tpu.memory_space<vmem>>, %arg4: memref<1x16x16xbf16, #tpu.memory_space<vmem>>, %arg5: memref<4x128xbf16, #tpu.memory_space<vmem>>, %arg6: memref<4x128xbf16, #tpu.memory_space<vmem>>, %arg7: memref<6x128xbf16, #tpu.memory_space<vmem>>, %arg8: memref<1x128xf32, #tpu.memory_space<vmem>>, %arg9: memref<128x4xbf16, #tpu.memory_space<vmem>>, %arg10: memref<1x4xf32, #tpu.memory_space<vmem>>, %arg11: memref<16x4xf32, #tpu.memory_space<vmem>>) attributes {dimension_semantics = [#tpu.dimension_semantics<parallel>], iteration_bounds = array<i64: 2>, scalar_prefetch = 0 : i64, scratch_operands = 0 : i64, tpu.core_type = #tpu.core_type<tc>, window_params = [{transform_indices = @transform_0, window_bounds = array<i64: 16, 4>}, {transform_indices = @transform_1, window_bounds = array<i64: 16, 1>}, {transform_indices = @transform_2, window_bounds = array<i64: 16, 6>}, {transform_indices = @transform_3, window_bounds = array<i64: 1, 16, 16>}, {pipeline_mode = #tpu.pipeline_mode<synchronous>, transform_indices = @transform_4, window_bounds = array<i64: 4, 128>}, {pipeline_mode = #tpu.pipeline_mode<synchronous>, transform_indices = @transform_5, window_bounds = array<i64: 4, 128>}, {pipeline_mode = #tpu.pipeline_mode<synchronous>, transform_indices = @transform_6, window_bounds = array<i64: 6, 128>}, {pipeline_mode = #tpu.pipeline_mode<synchronous>, transform_indices = @transform_7, window_bounds = array<i64: 1, 128>}, {pipeline_mode = #tpu.pipeline_mode<synchronous>, transform_indices = @transform_8, window_bounds = array<i64: 128, 4>}, {pipeline_mode = #tpu.pipeline_mode<synchronous>, transform_indices = @transform_9, window_bounds = array<i64: 1, 4>}, {transform_indices = @transform_10, window_bounds = array<i64: 16, 4>}]} {
    %c0 = arith.constant 0 : index
    %c0_0 = arith.constant 0 : index
    %0 = vector.load %arg1[%c0, %c0_0] : memref<16x4xf32, #tpu.memory_space<vmem>>, vector<16x4xf32>
    %c0_1 = arith.constant 0 : index
    %c0_2 = arith.constant 0 : index
    %1 = vector.load %arg2[%c0_1, %c0_2] : memref<16x1xf32, #tpu.memory_space<vmem>>, vector<16x1xf32>
    %2 = vector.shape_cast %1 : vector<16x1xf32> to vector<16x1xf32>
    %3 = vector.broadcast %2 : vector<16x1xf32> to vector<16x4xf32>
    %c0_3 = arith.constant 0 : index
    %c0_4 = arith.constant 0 : index
    %c0_5 = arith.constant 0 : index
    %4 = vector.load %arg4[%c0_3, %c0_4, %c0_5] : memref<1x16x16xbf16, #tpu.memory_space<vmem>>, vector<1x16x16xbf16>
    %5 = vector.shape_cast %4 : vector<1x16x16xbf16> to vector<16x16xbf16>
    %c0_6 = arith.constant 0 : index
    %c0_7 = arith.constant 0 : index
    %6 = vector.load %arg5[%c0_6, %c0_7] : memref<4x128xbf16, #tpu.memory_space<vmem>>, vector<4x128xbf16>
    %c0_8 = arith.constant 0 : index
    %c0_9 = arith.constant 0 : index
    %7 = vector.load %arg6[%c0_8, %c0_9] : memref<4x128xbf16, #tpu.memory_space<vmem>>, vector<4x128xbf16>
    %c0_10 = arith.constant 0 : index
    %c0_11 = arith.constant 0 : index
    %8 = vector.load %arg7[%c0_10, %c0_11] : memref<6x128xbf16, #tpu.memory_space<vmem>>, vector<6x128xbf16>
    %c0_12 = arith.constant 0 : index
    %c0_13 = arith.constant 0 : index
    %9 = vector.load %arg8[%c0_12, %c0_13] : memref<1x128xf32, #tpu.memory_space<vmem>>, vector<1x128xf32>
    %c0_14 = arith.constant 0 : index
    %c0_15 = arith.constant 0 : index
    %10 = vector.load %arg9[%c0_14, %c0_15] : memref<128x4xbf16, #tpu.memory_space<vmem>>, vector<128x4xbf16>
    %c0_16 = arith.constant 0 : index
    %c0_17 = arith.constant 0 : index
    %11 = vector.load %arg10[%c0_16, %c0_17] : memref<1x4xf32, #tpu.memory_space<vmem>>, vector<1x4xf32>
    %c0_18 = arith.constant 0 : index
    %c0_19 = arith.constant 0 : index
    %12 = vector.load %arg3[%c0_18, %c0_19] : memref<16x6xf32, #tpu.memory_space<vmem>>, vector<16x6xf32>
    %13 = arith.truncf %12 : vector<16x6xf32> to vector<16x6xbf16>
    %cst = arith.constant dense<0.000000e+00> : vector<16x128xf32>
    %14 = tpu.matmul %13, %8, %cst {dimension_numbers = #tpu.dot_dimension_numbers<[1], [0], [0], [1], [0, 0, 1, 1], [], []>} : vector<16x6xbf16>, vector<6x128xbf16>, vector<16x128xf32> -> vector<16x128xf32>
    %15 = vector.broadcast %9 : vector<1x128xf32> to vector<16x128xf32>
    %16 = arith.addf %14, %15 : vector<16x128xf32>
    %17 = arith.truncf %0 : vector<16x4xf32> to vector<16x4xbf16>
    %cst_20 = arith.constant dense<0.000000e+00> : vector<16x4xf32>
    %18 = tpu.matmul %5, %17, %cst_20 {dimension_numbers = #tpu.dot_dimension_numbers<[1], [0], [0], [1], [0, 0, 1, 1], [], []>} : vector<16x16xbf16>, vector<16x4xbf16>, vector<16x4xf32> -> vector<16x4xf32>
    %cst_21 = arith.constant dense<0.000000e+00> : vector<16x128xf32>
    %19 = tpu.matmul %17, %6, %cst_21 {dimension_numbers = #tpu.dot_dimension_numbers<[1], [0], [0], [1], [0, 0, 1, 1], [], []>} : vector<16x4xbf16>, vector<4x128xbf16>, vector<16x128xf32> -> vector<16x128xf32>
    %20 = arith.truncf %18 : vector<16x4xf32> to vector<16x4xbf16>
    %cst_22 = arith.constant dense<0.000000e+00> : vector<16x128xf32>
    %21 = tpu.matmul %20, %7, %cst_22 {dimension_numbers = #tpu.dot_dimension_numbers<[1], [0], [0], [1], [0, 0, 1, 1], [], []>} : vector<16x4xbf16>, vector<4x128xbf16>, vector<16x128xf32> -> vector<16x128xf32>
    %22 = arith.addf %19, %21 : vector<16x128xf32>
    %23 = arith.addf %22, %16 : vector<16x128xf32>
    %24 = math.tanh %23 : vector<16x128xf32>
    %25 = arith.truncf %24 : vector<16x128xf32> to vector<16x128xbf16>
    %cst_23 = arith.constant dense<0.000000e+00> : vector<16x4xf32>
    %26 = tpu.matmul %25, %10, %cst_23 {dimension_numbers = #tpu.dot_dimension_numbers<[1], [0], [0], [1], [0, 0, 1, 1], [], []>} : vector<16x128xbf16>, vector<128x4xbf16>, vector<16x4xf32> -> vector<16x4xf32>
    %27 = vector.broadcast %11 : vector<1x4xf32> to vector<16x4xf32>
    %28 = arith.addf %26, %27 : vector<16x4xf32>
    %cst_24 = arith.constant 5.000000e-01 : f32
    %29 = vector.broadcast %cst_24 : f32 to vector<16x4xf32>
    %30 = arith.mulf %29, %28 : vector<16x4xf32>
    %31 = arith.mulf %30, %3 : vector<16x4xf32>
    %32 = arith.addf %0, %31 : vector<16x4xf32>
    %33 = arith.truncf %32 : vector<16x4xf32> to vector<16x4xbf16>
    %cst_25 = arith.constant dense<0.000000e+00> : vector<16x4xf32>
    %34 = tpu.matmul %5, %33, %cst_25 {dimension_numbers = #tpu.dot_dimension_numbers<[1], [0], [0], [1], [0, 0, 1, 1], [], []>} : vector<16x16xbf16>, vector<16x4xbf16>, vector<16x4xf32> -> vector<16x4xf32>
    %cst_26 = arith.constant dense<0.000000e+00> : vector<16x128xf32>
    %35 = tpu.matmul %33, %6, %cst_26 {dimension_numbers = #tpu.dot_dimension_numbers<[1], [0], [0], [1], [0, 0, 1, 1], [], []>} : vector<16x4xbf16>, vector<4x128xbf16>, vector<16x128xf32> -> vector<16x128xf32>
    %36 = arith.truncf %34 : vector<16x4xf32> to vector<16x4xbf16>
    %cst_27 = arith.constant dense<0.000000e+00> : vector<16x128xf32>
    %37 = tpu.matmul %36, %7, %cst_27 {dimension_numbers = #tpu.dot_dimension_numbers<[1], [0], [0], [1], [0, 0, 1, 1], [], []>} : vector<16x4xbf16>, vector<4x128xbf16>, vector<16x128xf32> -> vector<16x128xf32>
    %38 = arith.addf %35, %37 : vector<16x128xf32>
    %39 = arith.addf %38, %16 : vector<16x128xf32>
    %40 = math.tanh %39 : vector<16x128xf32>
    %41 = arith.truncf %40 : vector<16x128xf32> to vector<16x128xbf16>
    %cst_28 = arith.constant dense<0.000000e+00> : vector<16x4xf32>
    %42 = tpu.matmul %41, %10, %cst_28 {dimension_numbers = #tpu.dot_dimension_numbers<[1], [0], [0], [1], [0, 0, 1, 1], [], []>} : vector<16x128xbf16>, vector<128x4xbf16>, vector<16x4xf32> -> vector<16x4xf32>
    %43 = vector.broadcast %11 : vector<1x4xf32> to vector<16x4xf32>
    %44 = arith.addf %42, %43 : vector<16x4xf32>
    %cst_29 = arith.constant 2.000000e+00 : f32
    %45 = vector.broadcast %cst_29 : f32 to vector<16x4xf32>
    %46 = arith.mulf %45, %44 : vector<16x4xf32>
    %47 = arith.addf %28, %46 : vector<16x4xf32>
    %cst_30 = arith.constant 5.000000e-01 : f32
    %48 = vector.broadcast %cst_30 : f32 to vector<16x4xf32>
    %49 = arith.mulf %48, %44 : vector<16x4xf32>
    %50 = arith.mulf %49, %3 : vector<16x4xf32>
    %51 = arith.addf %0, %50 : vector<16x4xf32>
    %52 = arith.truncf %51 : vector<16x4xf32> to vector<16x4xbf16>
    %cst_31 = arith.constant dense<0.000000e+00> : vector<16x4xf32>
    %53 = tpu.matmul %5, %52, %cst_31 {dimension_numbers = #tpu.dot_dimension_numbers<[1], [0], [0], [1], [0, 0, 1, 1], [], []>} : vector<16x16xbf16>, vector<16x4xbf16>, vector<16x4xf32> -> vector<16x4xf32>
    %cst_32 = arith.constant dense<0.000000e+00> : vector<16x128xf32>
    %54 = tpu.matmul %52, %6, %cst_32 {dimension_numbers = #tpu.dot_dimension_numbers<[1], [0], [0], [1], [0, 0, 1, 1], [], []>} : vector<16x4xbf16>, vector<4x128xbf16>, vector<16x128xf32> -> vector<16x128xf32>
    %55 = arith.truncf %53 : vector<16x4xf32> to vector<16x4xbf16>
    %cst_33 = arith.constant dense<0.000000e+00> : vector<16x128xf32>
    %56 = tpu.matmul %55, %7, %cst_33 {dimension_numbers = #tpu.dot_dimension_numbers<[1], [0], [0], [1], [0, 0, 1, 1], [], []>} : vector<16x4xbf16>, vector<4x128xbf16>, vector<16x128xf32> -> vector<16x128xf32>
    %57 = arith.addf %54, %56 : vector<16x128xf32>
    %58 = arith.addf %57, %16 : vector<16x128xf32>
    %59 = math.tanh %58 : vector<16x128xf32>
    %60 = arith.truncf %59 : vector<16x128xf32> to vector<16x128xbf16>
    %cst_34 = arith.constant dense<0.000000e+00> : vector<16x4xf32>
    %61 = tpu.matmul %60, %10, %cst_34 {dimension_numbers = #tpu.dot_dimension_numbers<[1], [0], [0], [1], [0, 0, 1, 1], [], []>} : vector<16x128xbf16>, vector<128x4xbf16>, vector<16x4xf32> -> vector<16x4xf32>
    %62 = vector.broadcast %11 : vector<1x4xf32> to vector<16x4xf32>
    %63 = arith.addf %61, %62 : vector<16x4xf32>
    %cst_35 = arith.constant 2.000000e+00 : f32
    %64 = vector.broadcast %cst_35 : f32 to vector<16x4xf32>
    %65 = arith.mulf %64, %63 : vector<16x4xf32>
    %66 = arith.addf %47, %65 : vector<16x4xf32>
    %67 = arith.mulf %63, %3 : vector<16x4xf32>
    %68 = arith.addf %0, %67 : vector<16x4xf32>
    %69 = arith.truncf %68 : vector<16x4xf32> to vector<16x4xbf16>
    %cst_36 = arith.constant dense<0.000000e+00> : vector<16x4xf32>
    %70 = tpu.matmul %5, %69, %cst_36 {dimension_numbers = #tpu.dot_dimension_numbers<[1], [0], [0], [1], [0, 0, 1, 1], [], []>} : vector<16x16xbf16>, vector<16x4xbf16>, vector<16x4xf32> -> vector<16x4xf32>
    %cst_37 = arith.constant dense<0.000000e+00> : vector<16x128xf32>
    %71 = tpu.matmul %69, %6, %cst_37 {dimension_numbers = #tpu.dot_dimension_numbers<[1], [0], [0], [1], [0, 0, 1, 1], [], []>} : vector<16x4xbf16>, vector<4x128xbf16>, vector<16x128xf32> -> vector<16x128xf32>
    %72 = arith.truncf %70 : vector<16x4xf32> to vector<16x4xbf16>
    %cst_38 = arith.constant dense<0.000000e+00> : vector<16x128xf32>
    %73 = tpu.matmul %72, %7, %cst_38 {dimension_numbers = #tpu.dot_dimension_numbers<[1], [0], [0], [1], [0, 0, 1, 1], [], []>} : vector<16x4xbf16>, vector<4x128xbf16>, vector<16x128xf32> -> vector<16x128xf32>
    %74 = arith.addf %71, %73 : vector<16x128xf32>
    %75 = arith.addf %74, %16 : vector<16x128xf32>
    %76 = math.tanh %75 : vector<16x128xf32>
    %77 = arith.truncf %76 : vector<16x128xf32> to vector<16x128xbf16>
    %cst_39 = arith.constant dense<0.000000e+00> : vector<16x4xf32>
    %78 = tpu.matmul %77, %10, %cst_39 {dimension_numbers = #tpu.dot_dimension_numbers<[1], [0], [0], [1], [0, 0, 1, 1], [], []>} : vector<16x128xbf16>, vector<128x4xbf16>, vector<16x4xf32> -> vector<16x4xf32>
    %79 = vector.broadcast %11 : vector<1x4xf32> to vector<16x4xf32>
    %80 = arith.addf %78, %79 : vector<16x4xf32>
    %81 = arith.addf %66, %80 : vector<16x4xf32>
    %cst_40 = arith.constant 0.166666672 : f32
    %82 = vector.broadcast %cst_40 : f32 to vector<16x4xf32>
    %83 = arith.mulf %81, %82 : vector<16x4xf32>
    %c0_41 = arith.constant 0 : index
    %c0_42 = arith.constant 0 : index
    %84 = vector.load %arg11[%c0_41, %c0_42] : memref<16x4xf32, #tpu.memory_space<vmem>>, vector<16x4xf32>
    tpu.vector_store %arg11[%c0_41, %c0_42], %83 {strides = array<i32>} : memref<16x4xf32, #tpu.memory_space<vmem>>, vector<16x4xf32>,
    return
  }
  func.func @transform_0(%arg0: i32) -> (i32, i32) {
    %c0_i32 = arith.constant 0 : i32
    %c0_i32_0 = arith.constant 0 : i32
    return %arg0, %c0_i32 : i32, i32
  }
  func.func @transform_1(%arg0: i32) -> (i32, i32) {
    %c0_i32 = arith.constant 0 : i32
    %c0_i32_0 = arith.constant 0 : i32
    return %arg0, %c0_i32 : i32, i32
  }
  func.func @transform_2(%arg0: i32) -> (i32, i32) {
    %c0_i32 = arith.constant 0 : i32
    %c0_i32_0 = arith.constant 0 : i32
    return %arg0, %c0_i32 : i32, i32
  }
  func.func @transform_3(%arg0: i32) -> (i32, i32, i32) {
    %c0_i32 = arith.constant 0 : i32
    %c0_i32_0 = arith.constant 0 : i32
    %c0_i32_1 = arith.constant 0 : i32
    return %arg0, %c0_i32, %c0_i32_0 : i32, i32, i32
  }
  func.func @transform_4(%arg0: i32) -> (i32, i32) {
    %c0_i32 = arith.constant 0 : i32
    %c0_i32_0 = arith.constant 0 : i32
    %c0_i32_1 = arith.constant 0 : i32
    return %c0_i32, %c0_i32_0 : i32, i32
  }
  func.func @transform_5(%arg0: i32) -> (i32, i32) {
    %c0_i32 = arith.constant 0 : i32
    %c0_i32_0 = arith.constant 0 : i32
    %c0_i32_1 = arith.constant 0 : i32
    return %c0_i32, %c0_i32_0 : i32, i32
  }
  func.func @transform_6(%arg0: i32) -> (i32, i32) {
    %c0_i32 = arith.constant 0 : i32
    %c0_i32_0 = arith.constant 0 : i32
    %c0_i32_1 = arith.constant 0 : i32
    return %c0_i32, %c0_i32_0 : i32, i32
  }
  func.func @transform_7(%arg0: i32) -> (i32, i32) {
    %c0_i32 = arith.constant 0 : i32
    %c0_i32_0 = arith.constant 0 : i32
    %c0_i32_1 = arith.constant 0 : i32
    return %c0_i32, %c0_i32_0 : i32, i32
  }
  func.func @transform_8(%arg0: i32) -> (i32, i32) {
    %c0_i32 = arith.constant 0 : i32
    %c0_i32_0 = arith.constant 0 : i32
    %c0_i32_1 = arith.constant 0 : i32
    return %c0_i32, %c0_i32_0 : i32, i32
  }
  func.func @transform_9(%arg0: i32) -> (i32, i32) {
    %c0_i32 = arith.constant 0 : i32
    %c0_i32_0 = arith.constant 0 : i32
    %c0_i32_1 = arith.constant 0 : i32
    return %c0_i32, %c0_i32_0 : i32, i32
  }
  func.func @transform_10(%arg0: i32) -> (i32, i32) {
    %c0_i32 = arith.constant 0 : i32
    %c0_i32_0 = arith.constant 0 : i32
    return %arg0, %c0_i32 : i32, i32
  }
}

</mosaic_0001>

<llo_original>
// kernel: tpu_custom_call.1
$region0: #{tpu_custom_call.1}
  #allocation0 [shape = 'u32[]', space=smem, size = 0x4, offset = 0x4, fixed_abs, tag = 'smem constant byte address 0x4 - core index']
  #allocation1 [shape = 'u32[144,128]{1,0:T(1,128)}', space=vmem, size = 0x12000, scoped, tag = 'internal scratch']
  %s0 = inlined_call_operand.vmem [shape: f32[32,4], index: 0, kind: input, shape index: {}]
  %s1 = inlined_call_operand.vmem [shape: f32[32,1], index: 1, kind: input, shape index: {}]
  %s2 = inlined_call_operand.vmem [shape: f32[32,6], index: 2, kind: input, shape index: {}]
  %s3 = inlined_call_operand.vmem [shape: bf16[2,16,16], index: 3, kind: input, shape index: {}]
  %s4 = inlined_call_operand.vmem [shape: bf16[4,128], index: 4, kind: input, shape index: {}]
  %s5 = inlined_call_operand.vmem [shape: bf16[4,128], index: 5, kind: input, shape index: {}]
  %s6 = inlined_call_operand.vmem [shape: bf16[6,128], index: 6, kind: input, shape index: {}]
  %s7 = inlined_call_operand.vmem [shape: f32[1,128], index: 7, kind: input, shape index: {}]
  %s8 = inlined_call_operand.vmem [shape: bf16[128,4], index: 8, kind: input, shape index: {}]
  %s9 = inlined_call_operand.vmem [shape: f32[1,4], index: 9, kind: input, shape index: {}]
  %s10 = inlined_call_operand.vmem [shape: f32[32,4], index: 10, kind: output, shape index: {}]
  %s11 = sld [smem:[#allocation0]]
  $region73: #{tpu_custom_call.1} parent=0
    _
  %s13 = ssub.s32 1, %s11
  %s14 = scalar_select 0, %s13, %s11
  loop: start=0, step=1, limit=4
  $region2: #{tpu_custom_call.1} parent=0 // loop_pre_header
    _
  $region3: #{tpu_custom_call.1} parent=0 // loop_header
    %s16 = sphi 0, %s20
    %p17 = scmp.ge.s32.totalorder %s16, 4
    %s26 = sphi 0, %s28
    %s29 = sphi 0, %s26
    %s30 = sphi 0, %s29
    %s46 = sphi 0, %s30
    %s52 = sphi 0, %s54
    %s55 = sphi 0, %s52
    %s56 = sphi 0, %s55
    %s72 = sphi 0, %s56
    %s78 = sphi 0, %s80
    %s81 = sphi 0, %s78
    %s82 = sphi 0, %s81
    %s98 = sphi 0, %s82
    %s104 = sphi 0, %s106
    %s107 = sphi 0, %s104
    %s108 = sphi 0, %s107
    %s124 = sphi 0, %s108
    %s128 = sphi 0, %s128
    %s130 = sphi 0, %s128
    %s131 = sphi 0, %s130
    %s145 = sphi 0, %s131
    %s149 = sphi 0, %s149
    %s151 = sphi 0, %s149
    %s152 = sphi 0, %s151
    %s166 = sphi 0, %s152
    %s170 = sphi 0, %s170
    %s172 = sphi 0, %s170
    %s173 = sphi 0, %s172
    %s187 = sphi 0, %s173
    %s191 = sphi 0, %s191
    %s193 = sphi 0, %s191
    %s194 = sphi 0, %s193
    %s208 = sphi 0, %s194
    %s212 = sphi 0, %s212
    %s214 = sphi 0, %s212
    %s215 = sphi 0, %s214
    %s229 = sphi 0, %s215
    %s233 = sphi 0, %s233
    %s235 = sphi 0, %s233
    %s236 = sphi 0, %s235
    %s250 = sphi 0, %s236
    %s256 = sphi 0, %s258
    %s259 = sphi 0, %s256
    %s260 = sphi 0, %s259
    %s276 = sphi 0, %s260
  $region4: #{tpu_custom_call.1} parent=0 // loop_header_branch
    %19 = sbr.rel (%p17) target = $region8
  $region5: #{tpu_custom_call.1} parent=0 // loop_body
    %s21 = ssub.s32 %s16, 1
    %s22 = ssub.s32 %s16, 2
    %s23 = sadd.s32 %s16, 1
    %s24 = ssub.s32 %s16, %s23
    %p25 = scmp.eq.s32.totalorder %s24, 0
    %s27 = sadd.s32 %s26, 1
    %s28 = scalar_select %p25, %s26, %s27
    %p31 = pneg %p25
    %p32 = scmp.eq.s32.totalorder %s16, 1
    %p33 = por %p31, %p32
    %p34 = scmp.ne.s32.totalorder %s26, %s29
    %p35 = scmp.eq.s32.totalorder %s16, 0
    %p36 = por %p34, %p35
    %p37 = scmp.ne.s32.totalorder %s26, %s29
    %p38 = scmp.eq.s32.totalorder %s21, 1
    %p39 = por %p37, %p38
    %p40 = scmp.ne.s32.totalorder %s29, %s30
    %p41 = scmp.eq.s32.totalorder %s21, 0
    %p42 = por %p40, %p41
    %p43 = scmp.ne.s32.totalorder %s29, %s30
    %p44 = scmp.eq.s32.totalorder %s22, 1
    %p45 = por %p43, %p44
    %p47 = scmp.ne.s32.totalorder %s30, %s46
    %p48 = scmp.eq.s32.totalorder %s22, 0
    %p49 = por %p47, %p48
    %s50 = ssub.s32 %s16, %s23
    %p51 = scmp.eq.s32.totalorder %s50, 0
    %s53 = sadd.s32 %s52, 1
    %s54 = scalar_select %p51, %s52, %s53
    %p57 = pneg %p51
    %p58 = scmp.eq.s32.totalorder %s16, 1
    %p59 = por %p57, %p58
    %p60 = scmp.ne.s32.totalorder %s52, %s55
    %p61 = scmp.eq.s32.totalorder %s16, 0
    %p62 = por %p60, %p61
    %p63 = scmp.ne.s32.totalorder %s52, %s55
    %p64 = scmp.eq.s32.totalorder %s21, 1
    %p65 = por %p63, %p64
    %p66 = scmp.ne.s32.totalorder %s55, %s56
    %p67 = scmp.eq.s32.totalorder %s21, 0
    %p68 = por %p66, %p67
    %p69 = scmp.ne.s32.totalorder %s55, %s56
    %p70 = scmp.eq.s32.totalorder %s22, 1
    %p71 = por %p69, %p70
    %p73 = scmp.ne.s32.totalorder %s56, %s72
    %p74 = scmp.eq.s32.totalorder %s22, 0
    %p75 = por %p73, %p74
    %s76 = ssub.s32 %s16, %s23
    %p77 = scmp.eq.s32.totalorder %s76, 0
    %s79 = sadd.s32 %s78, 1
    %s80 = scalar_select %p77, %s78, %s79
    %p83 = pneg %p77
    %p84 = scmp.eq.s32.totalorder %s16, 1
    %p85 = por %p83, %p84
    %p86 = scmp.ne.s32.totalorder %s78, %s81
    %p87 = scmp.eq.s32.totalorder %s16, 0
    %p88 = por %p86, %p87
    %p89 = scmp.ne.s32.totalorder %s78, %s81
    %p90 = scmp.eq.s32.totalorder %s21, 1
    %p91 = por %p89, %p90
    %p92 = scmp.ne.s32.totalorder %s81, %s82
    %p93 = scmp.eq.s32.totalorder %s21, 0
    %p94 = por %p92, %p93
    %p95 = scmp.ne.s32.totalorder %s81, %s82
    %p96 = scmp.eq.s32.totalorder %s22, 1
    %p97 = por %p95, %p96
    %p99 = scmp.ne.s32.totalorder %s82, %s98
    %p100 = scmp.eq.s32.totalorder %s22, 0
    %p101 = por %p99, %p100
    %s102 = ssub.s32 %s16, %s23
    %p103 = scmp.eq.s32.totalorder %s102, 0
    %s105 = sadd.s32 %s104, 1
    %s106 = scalar_select %p103, %s104, %s105
    %p109 = pneg %p103
    %p110 = scmp.eq.s32.totalorder %s16, 1
    %p111 = por %p109, %p110
    %p112 = scmp.ne.s32.totalorder %s104, %s107
    %p113 = scmp.eq.s32.totalorder %s16, 0
    %p114 = por %p112, %p113
    %p115 = scmp.ne.s32.totalorder %s104, %s107
    %p116 = scmp.eq.s32.totalorder %s21, 1
    %p117 = por %p115, %p116
    %p118 = scmp.ne.s32.totalorder %s107, %s108
    %p119 = scmp.eq.s32.totalorder %s21, 0
    %p120 = por %p118, %p119
    %p121 = scmp.ne.s32.totalorder %s107, %s108
    %p122 = scmp.eq.s32.totalorder %s22, 1
    %p123 = por %p121, %p122
    %p125 = scmp.ne.s32.totalorder %s108, %s124
    %p126 = scmp.eq.s32.totalorder %s22, 0
    %p127 = por %p125, %p126
    %s129 = sadd.s32 %s128, 1
    %p132 = scmp.eq.s32.totalorder %s16, 1
    %p133 = scmp.ne.s32.totalorder %s128, %s130
    %p134 = scmp.eq.s32.totalorder %s16, 0
    %p135 = por %p133, %p134
    %p136 = scmp.ne.s32.totalorder %s128, %s130
    %p137 = scmp.eq.s32.totalorder %s21, 1
    %p138 = por %p136, %p137
    %p139 = scmp.ne.s32.totalorder %s130, %s131
    %p140 = scmp.eq.s32.totalorder %s21, 0
    %p141 = por %p139, %p140
    %p142 = scmp.ne.s32.totalorder %s130, %s131
    %p143 = scmp.eq.s32.totalorder %s22, 1
    %p144 = por %p142, %p143
    %p146 = scmp.ne.s32.totalorder %s131, %s145
    %p147 = scmp.eq.s32.totalorder %s22, 0
    %p148 = por %p146, %p147
    %s150 = sadd.s32 %s149, 1
    %p153 = scmp.eq.s32.totalorder %s16, 1
    %p154 = scmp.ne.s32.totalorder %s149, %s151
    %p155 = scmp.eq.s32.totalorder %s16, 0
    %p156 = por %p154, %p155
    %p157 = scmp.ne.s32.totalorder %s149, %s151
    %p158 = scmp.eq.s32.totalorder %s21, 1
    %p159 = por %p157, %p158
    %p160 = scmp.ne.s32.totalorder %s151, %s152
    %p161 = scmp.eq.s32.totalorder %s21, 0
    %p162 = por %p160, %p161
    %p163 = scmp.ne.s32.totalorder %s151, %s152
    %p164 = scmp.eq.s32.totalorder %s22, 1
    %p165 = por %p163, %p164
    %p167 = scmp.ne.s32.totalorder %s152, %s166
    %p168 = scmp.eq.s32.totalorder %s22, 0
    %p169 = por %p167, %p168
    %s171 = sadd.s32 %s170, 1
    %p174 = scmp.eq.s32.totalorder %s16, 1
    %p175 = scmp.ne.s32.totalorder %s170, %s172
    %p176 = scmp.eq.s32.totalorder %s16, 0
    %p177 = por %p175, %p176
    %p178 = scmp.ne.s32.totalorder %s170, %s172
    %p179 = scmp.eq.s32.totalorder %s21, 1
    %p180 = por %p178, %p179
    %p181 = scmp.ne.s32.totalorder %s172, %s173
    %p182 = scmp.eq.s32.totalorder %s21, 0
    %p183 = por %p181, %p182
    %p184 = scmp.ne.s32.totalorder %s172, %s173
    %p185 = scmp.eq.s32.totalorder %s22, 1
    %p186 = por %p184, %p185
    %p188 = scmp.ne.s32.totalorder %s173, %s187
    %p189 = scmp.eq.s32.totalorder %s22, 0
    %p190 = por %p188, %p189
    %s192 = sadd.s32 %s191, 1
    %p195 = scmp.eq.s32.totalorder %s16, 1
    %p196 = scmp.ne.s32.totalorder %s191, %s193
    %p197 = scmp.eq.s32.totalorder %s16, 0
    %p198 = por %p196, %p197
    %p199 = scmp.ne.s32.totalorder %s191, %s193
    %p200 = scmp.eq.s32.totalorder %s21, 1
    %p201 = por %p199, %p200
    %p202 = scmp.ne.s32.totalorder %s193, %s194
    %p203 = scmp.eq.s32.totalorder %s21, 0
    %p204 = por %p202, %p203
    %p205 = scmp.ne.s32.totalorder %s193, %s194
    %p206 = scmp.eq.s32.totalorder %s22, 1
    %p207 = por %p205, %p206
    %p209 = scmp.ne.s32.totalorder %s194, %s208
    %p210 = scmp.eq.s32.totalorder %s22, 0
    %p211 = por %p209, %p210
    %s213 = sadd.s32 %s212, 1
    %p216 = scmp.eq.s32.totalorder %s16, 1
    %p217 = scmp.ne.s32.totalorder %s212, %s214
    %p218 = scmp.eq.s32.totalorder %s16, 0
    %p219 = por %p217, %p218
    %p220 = scmp.ne.s32.totalorder %s212, %s214
    %p221 = scmp.eq.s32.totalorder %s21, 1
    %p222 = por %p220, %p221
    %p223 = scmp.ne.s32.totalorder %s214, %s215
    %p224 = scmp.eq.s32.totalorder %s21, 0
    %p225 = por %p223, %p224
    %p226 = scmp.ne.s32.totalorder %s214, %s215
    %p227 = scmp.eq.s32.totalorder %s22, 1
    %p228 = por %p226, %p227
    %p230 = scmp.ne.s32.totalorder %s215, %s229
    %p231 = scmp.eq.s32.totalorder %s22, 0
    %p232 = por %p230, %p231
    %s234 = sadd.s32 %s233, 1
    %p237 = scmp.eq.s32.totalorder %s16, 1
    %p238 = scmp.ne.s32.totalorder %s233, %s235
    %p239 = scmp.eq.s32.totalorder %s16, 0
    %p240 = por %p238, %p239
    %p241 = scmp.ne.s32.totalorder %s233, %s235
    %p242 = scmp.eq.s32.totalorder %s21, 1
    %p243 = por %p241, %p242
    %p244 = scmp.ne.s32.totalorder %s235, %s236
    %p245 = scmp.eq.s32.totalorder %s21, 0
    %p246 = por %p244, %p245
    %p247 = scmp.ne.s32.totalorder %s235, %s236
    %p248 = scmp.eq.s32.totalorder %s22, 1
    %p249 = por %p247, %p248
    %p251 = scmp.ne.s32.totalorder %s236, %s250
    %p252 = scmp.eq.s32.totalorder %s22, 0
    %p253 = por %p251, %p252
    %s254 = ssub.s32 %s16, %s23
    %p255 = scmp.eq.s32.totalorder %s254, 0
    %s257 = sadd.s32 %s256, 1
    %s258 = scalar_select %p255, %s256, %s257
    %p261 = pneg %p255
    %p262 = scmp.eq.s32.totalorder %s16, 1
    %p263 = por %p261, %p262
    %p264 = scmp.ne.s32.totalorder %s256, %s259
    %p265 = scmp.eq.s32.totalorder %s16, 0
    %p266 = por %p264, %p265
    %p267 = scmp.ne.s32.totalorder %s256, %s259
    %p268 = scmp.eq.s32.totalorder %s21, 1
    %p269 = por %p267, %p268
    %p270 = scmp.ne.s32.totalorder %s259, %s260
    %p271 = scmp.eq.s32.totalorder %s21, 0
    %p272 = por %p270, %p271
    %p273 = scmp.ne.s32.totalorder %s259, %s260
    %p274 = scmp.eq.s32.totalorder %s22, 1
    %p275 = por %p273, %p274
    %p277 = scmp.ne.s32.totalorder %s260, %s276
    %p278 = scmp.eq.s32.totalorder %s22, 0
    %p279 = por %p277, %p278
    %p280 = scmp.le.s32.totalorder 1, %s16
    %p281 = scmp.lt.s32.totalorder %s16, 3
    %p282 = pnand %p280, %p281
    %p283 = pneg %p282
    // Predicated region
    $region9: #{tpu_custom_call.1} parent=5 // pred_check
      _
    $region10: #{tpu_custom_call.1} parent=5 // pred_check_branch
      %285 = sbr.rel (%p282) target = $region12
    $region11: #{tpu_custom_call.1} parent=5 // pred_region
      %s286 = ssub.s32 %s16, 1
      // Predicated region
      $region13: #{tpu_custom_call.1} parent=11 // pred_check
        %p287 = pneg %p141
      $region14: #{tpu_custom_call.1} parent=11 // pred_check_branch
        %289 = sbr.rel (%p287) target = $region16
      $region15: #{tpu_custom_call.1} parent=11 // pred_region
        _
      $region16: #{tpu_custom_call.1} parent=11 // pred_fallthru
        _
      // Predicated region
      $region17: #{tpu_custom_call.1} parent=11 // pred_check
        %p290 = pneg %p162
      $region18: #{tpu_custom_call.1} parent=11 // pred_check_branch
        %292 = sbr.rel (%p290) target = $region20
      $region19: #{tpu_custom_call.1} parent=11 // pred_region
        _
      $region20: #{tpu_custom_call.1} parent=11 // pred_fallthru
        _
      // Predicated region
      $region21: #{tpu_custom_call.1} parent=11 // pred_check
        %p293 = pneg %p183
      $region22: #{tpu_custom_call.1} parent=11 // pred_check_branch
        %295 = sbr.rel (%p293) target = $region24
      $region23: #{tpu_custom_call.1} parent=11 // pred_region
        _
      $region24: #{tpu_custom_call.1} parent=11 // pred_fallthru
        _
      // Predicated region
      $region25: #{tpu_custom_call.1} parent=11 // pred_check
        %p296 = pneg %p204
      $region26: #{tpu_custom_call.1} parent=11 // pred_check_branch
        %298 = sbr.rel (%p296) target = $region28
      $region27: #{tpu_custom_call.1} parent=11 // pred_region
        _
      $region28: #{tpu_custom_call.1} parent=11 // pred_fallthru
        _
      // Predicated region
      $region29: #{tpu_custom_call.1} parent=11 // pred_check
        %p299 = pneg %p225
      $region30: #{tpu_custom_call.1} parent=11 // pred_check_branch
        %301 = sbr.rel (%p299) target = $region32
      $region31: #{tpu_custom_call.1} parent=11 // pred_region
        _
      $region32: #{tpu_custom_call.1} parent=11 // pred_fallthru
        _
      // Predicated region
      $region33: #{tpu_custom_call.1} parent=11 // pred_check
        %p302 = pneg %p246
      $region34: #{tpu_custom_call.1} parent=11 // pred_check_branch
        %304 = sbr.rel (%p302) target = $region36
      $region35: #{tpu_custom_call.1} parent=11 // pred_region
        _
      $region36: #{tpu_custom_call.1} parent=11 // pred_fallthru
        _
    $region12: #{tpu_custom_call.1} parent=5 // pred_fallthru
      _
    %p305 = scmp.lt.s32.totalorder %s16, 2
    // Predicated region
    $region37: #{tpu_custom_call.1} parent=5 // pred_check
      %p306 = pneg %p305
    $region38: #{tpu_custom_call.1} parent=5 // pred_check_branch
      %308 = sbr.rel (%p306) target = $region40
    $region39: #{tpu_custom_call.1} parent=5 // pred_region
      // Predicated region
      $region41: #{tpu_custom_call.1} parent=39 // pred_check
        %p309 = pneg %p36
      $region42: #{tpu_custom_call.1} parent=39 // pred_check_branch
        %311 = sbr.rel (%p309) target = $region44
      $region43: #{tpu_custom_call.1} parent=39 // pred_region
        %s312 = smul.u32 2, %s16
        %p313 = scmp.lt.s32.totalorder %s312, 3
        %s314 = scalar_select %p313, %s312, 3
        %s315 = smul.addr %s314, 8
        %s316 = scalar_lea.vmem %s0, %s315
        %s317 = smul.u32 2, %s16
      $region44: #{tpu_custom_call.1} parent=39 // pred_fallthru
        _
      // Predicated region
      $region45: #{tpu_custom_call.1} parent=39 // pred_check
        %p318 = pneg %p62
      $region46: #{tpu_custom_call.1} parent=39 // pred_check_branch
        %320 = sbr.rel (%p318) target = $region48
      $region47: #{tpu_custom_call.1} parent=39 // pred_region
        %s321 = smul.u32 2, %s16
        %p322 = scmp.lt.s32.totalorder %s321, 3
        %s323 = scalar_select %p322, %s321, 3
        %s324 = smul.addr %s323, 8
        %s325 = scalar_lea.vmem %s1, %s324
        %s326 = smul.u32 2, %s16
      $region48: #{tpu_custom_call.1} parent=39 // pred_fallthru
        _
      // Predicated region
      $region49: #{tpu_custom_call.1} parent=39 // pred_check
        %p327 = pneg %p88
      $region50: #{tpu_custom_call.1} parent=39 // pred_check_branch
        %329 = sbr.rel (%p327) target = $region52
      $region51: #{tpu_custom_call.1} parent=39 // pred_region
        %s330 = smul.u32 2, %s16
        %p331 = scmp.lt.s32.totalorder %s330, 3
        %s332 = scalar_select %p331, %s330, 3
        %s333 = smul.addr %s332, 8
        %s334 = scalar_lea.vmem %s2, %s333
        %s335 = smul.u32 2, %s16
      $region52: #{tpu_custom_call.1} parent=39 // pred_fallthru
        _
      // Predicated region
      $region53: #{tpu_custom_call.1} parent=39 // pred_check
        %p336 = pneg %p114
      $region54: #{tpu_custom_call.1} parent=39 // pred_check_branch
        %338 = sbr.rel (%p336) target = $region56
      $region55: #{tpu_custom_call.1} parent=39 // pred_region
        %p339 = scmp.lt.s32.totalorder %s16, 1
        %s340 = scalar_select %p339, %s16, 1
        %s341 = smul.addr %s340, 2
        %s342 = smul.addr %s341, 4
        %s343 = scalar_lea.vmem %s3, %s342
      $region56: #{tpu_custom_call.1} parent=39 // pred_fallthru
        _
    $region40: #{tpu_custom_call.1} parent=5 // pred_fallthru
      _
    %p344 = scmp.le.s32.totalorder 1, %s16
    %p345 = scmp.lt.s32.totalorder %s16, 3
    %p346 = pnand %p344, %p345
    %p347 = pneg %p346
    // Predicated region
    $region57: #{tpu_custom_call.1} parent=5 // pred_check
      _
    $region58: #{tpu_custom_call.1} parent=5 // pred_check_branch
      %349 = sbr.rel (%p346) target = $region60
    $region59: #{tpu_custom_call.1} parent=5 // pred_region
      %s350 = ssub.s32 %s16, 1
      %s351 = smul.u32 2, %s21
      %p352 = scmp.lt.s32.totalorder %s351, 3
      %s353 = scalar_select %p352, %s351, 3
      %s354 = smul.addr %s353, 8
      %s355 = scalar_lea.vmem %s0, %s354
      %p356 = pneg %p42
      %p357 = pneg %p39
      %s358 = smul.u32 2, %s21
      %p359 = scmp.lt.s32.totalorder %s358, 3
      %s360 = scalar_select %p359, %s358, 3
      %s361 = smul.addr %s360, 8
      %s362 = scalar_lea.vmem %s1, %s361
      %p363 = pneg %p68
      %p364 = pneg %p65
      %s365 = smul.u32 2, %s21
      %p366 = scmp.lt.s32.totalorder %s365, 3
      %s367 = scalar_select %p366, %s365, 3
      %s368 = smul.addr %s367, 8
      %s369 = scalar_lea.vmem %s2, %s368
      %p370 = pneg %p94
      %p371 = pneg %p91
      %p372 = scmp.lt.s32.totalorder %s21, 1
      %s373 = scalar_select %p372, %s21, 1
      %s374 = smul.addr %s373, 2
      %s375 = smul.addr %s374, 4
      %s376 = scalar_lea.vmem %s3, %s375
      %p377 = pneg %p120
      %p378 = pneg %p117
      %p379 = pneg %p141
      %p380 = pneg %p138
      %p381 = pneg %p162
      %p382 = pneg %p159
      %p383 = pneg %p183
      %p384 = pneg %p180
      %p385 = pneg %p204
      %p386 = pneg %p201
      %p387 = pneg %p225
      %p388 = pneg %p222
      %p389 = pneg %p246
      %p390 = pneg %p243
      %p391 = pneg %p272
      %p392 = pneg %p269
      %s393 = smul.u32 2, %s21
      %p394 = scmp.lt.s32.totalorder %s393, 3
      %s395 = scalar_select %p394, %s393, 3
      %s396 = smul.addr %s395, 8
      %s397 = scalar_lea.vmem %s10, %s396
      %s398 = smul.u32 2, %s21
      %p399 = scmp.lt.s32.totalorder %s398, 3
      %s400 = scalar_select %p399, %s398, 3
      %s401 = smul.addr %s400, 8
      %s402 = scalar_lea.vmem %s0, %s401
      %s403 = smul.u32 2, %s21
      %s404 = smul.u32 2, %s21
      %p405 = scmp.lt.s32.totalorder %s404, 3
      %s406 = scalar_select %p405, %s404, 3
      %s407 = smul.addr %s406, 8
      %s408 = scalar_lea.vmem %s1, %s407
      %s409 = smul.u32 2, %s21
      %s410 = smul.u32 2, %s21
      %p411 = scmp.lt.s32.totalorder %s410, 3
      %s412 = scalar_select %p411, %s410, 3
      %s413 = smul.addr %s412, 8
      %s414 = scalar_lea.vmem %s2, %s413
      %s415 = smul.u32 2, %s21
      %p416 = scmp.lt.s32.totalorder %s21, 1
      %s417 = scalar_select %p416, %s21, 1
      %s418 = smul.addr %s417, 2
      %s419 = smul.addr %s418, 4
      %s420 = scalar_lea.vmem %s3, %s419
      %s421 = smul.u32 2, %s21
      %p422 = scmp.lt.s32.totalorder %s421, 3
      %s423 = scalar_select %p422, %s421, 3
      %s424 = smul.addr %s423, 8
      %s425 = scalar_lea.vmem %s10, %s424
      %s426 = smul.u32 2, %s21
      %v428 = vld [vmem:[%s402] sm:$0xff]
      %v429 = vld [vmem:[%s402 + $0x8] sm:$0xff]
      %v430 = vld [vmem:[%s408] sm:$0xff]
      %v431 = vld [vmem:[%s408 + $0x8] sm:$0xff]
      %433 = vset.pattern.permute.xlu0 0
      %434 = vperm.xlu0 %433, %v430
      %v435 = vpop.permute.xlu0 %434
      %438 = vset.pattern.permute.xlu0 0
      %439 = vperm.xlu0 %438, %v431
      %v440 = vpop.permute.xlu0 %439
      %v442 = vld [vmem:[%s420] sm:$0xf]
      %v443 = vld [vmem:[%s420 + $0x4] sm:$0xf]
      %v444 = vld [vmem:[%s4] sm:$0x3]
      %v445 = vld [vmem:[%s5] sm:$0x3]
      %v446 = vld [vmem:[%s6] sm:$0x7]
      %v447 = vld [vmem:[%s7] sm:$0x1]
      %v448 = vld [vmem:[%s8] sm:$0xf]
      %v449 = vld [vmem:[%s8 + $0x4] sm:$0xf]
      %v450 = vld [vmem:[%s8 + $0x8] sm:$0xf]
      %v451 = vld [vmem:[%s8 + $0xc] sm:$0xf]
      %v452 = vld [vmem:[%s8 + $0x10] sm:$0xf]
      %v453 = vld [vmem:[%s8 + $0x14] sm:$0xf]
      %v454 = vld [vmem:[%s8 + $0x18] sm:$0xf]
      %v455 = vld [vmem:[%s8 + $0x1c] sm:$0xf]
      %v456 = vld [vmem:[%s8 + $0x20] sm:$0xf]
      %v457 = vld [vmem:[%s8 + $0x24] sm:$0xf]
      %v458 = vld [vmem:[%s8 + $0x28] sm:$0xf]
      %v459 = vld [vmem:[%s8 + $0x2c] sm:$0xf]
      %v460 = vld [vmem:[%s8 + $0x30] sm:$0xf]
      %v461 = vld [vmem:[%s8 + $0x34] sm:$0xf]
      %v462 = vld [vmem:[%s8 + $0x38] sm:$0xf]
      %v463 = vld [vmem:[%s8 + $0x3c] sm:$0xf]
      %v464 = vld [vmem:[%s9] sm:$0x1]
      %v465 = vld [vmem:[%s414] sm:$0xff]
      %v466 = vld [vmem:[%s414 + $0x8] sm:$0xff]
      %v467 = vpack.c.bf16 %v466, %v465
      %v469 = vlaneseq
      %v470 = vshrl.u32 %v469, 7
      %v471 = vsub.s32 0, %v470
      %v472 = vrot.slane %v447, %v471
      %vm474 = vcmask 48128
      %v476 = vsel %vm474, %v467, 0
      %vm478 = vcmask 1042432
      %v480 = vsel %vm478, %v446, 0
      %482 = vmatprep.subr.bf16.mxu0 0
      %483 = vmatpush1.bf16.msra.mxu0 %v480
      %484 = vmatprep.subr.bf16.mxu0 0
      %485 = vmatpush1.bf16.msra.mxu0 0
      %486 = vmatprep.subr.bf16.mxu0 0
      %487 = vmatpush1.bf16.msra.mxu0 0
      %488 = vmatprep.subr.bf16.mxu0 0
      %489 = vmatpush1.bf16.msra.mxu0 0
      %490 = vmatprep.subr.bf16.mxu0 0
      %491 = vmatpush1.bf16.msra.mxu0 0
      %492 = vmatprep.subr.bf16.mxu0 0
      %493 = vmatpush1.bf16.msra.mxu0 0
      %494 = vmatprep.subr.bf16.mxu0 0
      %495 = vmatpush1.bf16.msra.mxu0 0
      %496 = vmatprep.subr.bf16.mxu0 0
      %497 = vmatpush1.bf16.msra.mxu0 0
      %498 = vmatprep.subr.bf16.mxu0 0
      %499 = vmatpush1.bf16.msra.mxu0 0
      %500 = vmatprep.subr.bf16.mxu0 0
      %501 = vmatpush1.bf16.msra.mxu0 0
      %502 = vmatprep.subr.bf16.mxu0 0
      %503 = vmatpush1.bf16.msra.mxu0 0
      %504 = vmatprep.subr.bf16.mxu0 0
      %505 = vmatpush1.bf16.msra.mxu0 0
      %506 = vmatprep.subr.bf16.mxu0 0
      %507 = vmatpush1.bf16.msra.mxu0 0
      %508 = vmatprep.subr.bf16.mxu0 0
      %509 = vmatpush1.bf16.msra.mxu0 0
      %510 = vmatprep.subr.bf16.mxu0 0
      %511 = vmatpush1.bf16.msra.mxu0 0
      %512 = vmatprep.subr.bf16.mxu0 0
      %513 = vmatpush1.bf16.msra.mxu0 0
      %514 = vmatprep.mubr.bf16.mxu0 0
      %515 = vmatmul.mubr.bf16.gmra.mrb[0].mxu0 %v476
      %v516 = vpop.f32.mrb[0].mxu0
      %v517 = vadd.f32 %v472, %v516
      %v518 = vpop.f32.mrb[0].mxu0
      %v519 = vpop.f32.mrb[0].mxu0
      %v520 = vadd.f32 %v472, %v519
      %v521 = vpop.f32.mrb[0].mxu0
      %522 = vdwg.mxu0
      %v523 = vpack.c.bf16 %v429, %v428
      %v526 = vunpack.c.l.b16 %v442
      %v527 = vunpack.c.l.b16 %v443
      %v528 = vpack.c.b16 %v527, %v526
      %vm529 = vcmask 130048
      %v531 = vsel %vm529, %v528, 0
      %533 = vmatprep.subr.bf16.mxu0 0
      %534 = vmatpush1.bf16.msra.mxu0 %v523
      %535 = vmatprep.subr.bf16.mxu0 0
      %536 = vmatpush1.bf16.msra.mxu0 0
      %537 = vmatprep.subr.bf16.mxu0 0
      %538 = vmatpush1.bf16.msra.mxu0 0
      %539 = vmatprep.subr.bf16.mxu0 0
      %540 = vmatpush1.bf16.msra.mxu0 0
      %541 = vmatprep.subr.bf16.mxu0 0
      %542 = vmatpush1.bf16.msra.mxu0 0
      %543 = vmatprep.subr.bf16.mxu0 0
      %544 = vmatpush1.bf16.msra.mxu0 0
      %545 = vmatprep.subr.bf16.mxu0 0
      %546 = vmatpush1.bf16.msra.mxu0 0
      %547 = vmatprep.subr.bf16.mxu0 0
      %548 = vmatpush1.bf16.msra.mxu0 0
      %549 = vmatprep.subr.bf16.mxu0 0
      %550 = vmatpush1.bf16.msra.mxu0 0
      %551 = vmatprep.subr.bf16.mxu0 0
      %552 = vmatpush1.bf16.msra.mxu0 0
      %553 = vmatprep.subr.bf16.mxu0 0
      %554 = vmatpush1.bf16.msra.mxu0 0
      %555 = vmatprep.subr.bf16.mxu0 0
      %556 = vmatpush1.bf16.msra.mxu0 0
      %557 = vmatprep.subr.bf16.mxu0 0
      %558 = vmatpush1.bf16.msra.mxu0 0
      %559 = vmatprep.subr.bf16.mxu0 0
      %560 = vmatpush1.bf16.msra.mxu0 0
      %561 = vmatprep.subr.bf16.mxu0 0
      %562 = vmatpush1.bf16.msra.mxu0 0
      %563 = vmatprep.subr.bf16.mxu0 0
      %564 = vmatpush1.bf16.msra.mxu0 0
      %565 = vmatprep.mubr.bf16.mxu0 0
      %566 = vmatmul.mubr.bf16.gmra.mrb[0].mxu0 %v531
      %v567 = vpop.f32.mrb[0].mxu0
      %v568 = vadd.f32 0.0, %v567
      %v569 = vpop.f32.mrb[0].mxu0
      %v570 = vpop.f32.mrb[0].mxu0
      %v571 = vadd.f32 0.0, %v570
      %v572 = vpop.f32.mrb[0].mxu0
      %573 = vdwg.mxu0
      %v574 = vpack.c.bf16 %v571, %v568
      %vm575 = vcmask 31744
      %v577 = vsel %vm575, %v574, 0
      %vm579 = vcmask 1041408
      %v581 = vsel %vm579, %v445, 0
      %583 = vmatprep.subr.bf16.mxu0 0
      %584 = vmatpush1.bf16.msra.mxu0 %v581
      %585 = vmatprep.subr.bf16.mxu0 0
      %586 = vmatpush1.bf16.msra.mxu0 0
      %587 = vmatprep.subr.bf16.mxu0 0
      %588 = vmatpush1.bf16.msra.mxu0 0
      %589 = vmatprep.subr.bf16.mxu0 0
      %590 = vmatpush1.bf16.msra.mxu0 0
      %591 = vmatprep.subr.bf16.mxu0 0
      %592 = vmatpush1.bf16.msra.mxu0 0
      %593 = vmatprep.subr.bf16.mxu0 0
      %594 = vmatpush1.bf16.msra.mxu0 0
      %595 = vmatprep.subr.bf16.mxu0 0
      %596 = vmatpush1.bf16.msra.mxu0 0
      %597 = vmatprep.subr.bf16.mxu0 0
      %598 = vmatpush1.bf16.msra.mxu0 0
      %599 = vmatprep.subr.bf16.mxu0 0
      %600 = vmatpush1.bf16.msra.mxu0 0
      %601 = vmatprep.subr.bf16.mxu0 0
      %602 = vmatpush1.bf16.msra.mxu0 0
      %603 = vmatprep.subr.bf16.mxu0 0
      %604 = vmatpush1.bf16.msra.mxu0 0
      %605 = vmatprep.subr.bf16.mxu0 0
      %606 = vmatpush1.bf16.msra.mxu0 0
      %607 = vmatprep.subr.bf16.mxu0 0
      %608 = vmatpush1.bf16.msra.mxu0 0
      %609 = vmatprep.subr.bf16.mxu0 0
      %610 = vmatpush1.bf16.msra.mxu0 0
      %611 = vmatprep.subr.bf16.mxu0 0
      %612 = vmatpush1.bf16.msra.mxu0 0
      %613 = vmatprep.subr.bf16.mxu0 0
      %614 = vmatpush1.bf16.msra.mxu0 0
      %615 = vmatprep.mubr.bf16.mxu0 0
      %616 = vmatmul.mubr.bf16.gmra.mrb[0].mxu0 %v577
      %v617 = vpop.f32.mrb[0].mxu0
      %v618 = vadd.f32 0.0, %v617
      %v619 = vpop.f32.mrb[0].mxu0
      %v620 = vpop.f32.mrb[0].mxu0
      %v621 = vadd.f32 0.0, %v620
      %v622 = vpop.f32.mrb[0].mxu0
      %623 = vdwg.mxu0
      %v625 = vsel %vm575, %v523, 0
      %v628 = vsel %vm579, %v444, 0
      %630 = vmatprep.subr.bf16.mxu0 0
      %631 = vmatpush1.bf16.msra.mxu0 %v628
      %632 = vmatprep.subr.bf16.mxu0 0
      %633 = vmatpush1.bf16.msra.mxu0 0
      %634 = vmatprep.subr.bf16.mxu0 0
      %635 = vmatpush1.bf16.msra.mxu0 0
      %636 = vmatprep.subr.bf16.mxu0 0
      %637 = vmatpush1.bf16.msra.mxu0 0
      %638 = vmatprep.subr.bf16.mxu0 0
      %639 = vmatpush1.bf16.msra.mxu0 0
      %640 = vmatprep.subr.bf16.mxu0 0
      %641 = vmatpush1.bf16.msra.mxu0 0
      %642 = vmatprep.subr.bf16.mxu0 0
      %643 = vmatpush1.bf16.msra.mxu0 0
      %644 = vmatprep.subr.bf16.mxu0 0
      %645 = vmatpush1.bf16.msra.mxu0 0
      %646 = vmatprep.subr.bf16.mxu0 0
      %647 = vmatpush1.bf16.msra.mxu0 0
      %648 = vmatprep.subr.bf16.mxu0 0
      %649 = vmatpush1.bf16.msra.mxu0 0
      %650 = vmatprep.subr.bf16.mxu0 0
      %651 = vmatpush1.bf16.msra.mxu0 0
      %652 = vmatprep.subr.bf16.mxu0 0
      %653 = vmatpush1.bf16.msra.mxu0 0
      %654 = vmatprep.subr.bf16.mxu0 0
      %655 = vmatpush1.bf16.msra.mxu0 0
      %656 = vmatprep.subr.bf16.mxu0 0
      %657 = vmatpush1.bf16.msra.mxu0 0
      %658 = vmatprep.subr.bf16.mxu0 0
      %659 = vmatpush1.bf16.msra.mxu0 0
      %660 = vmatprep.subr.bf16.mxu0 0
      %661 = vmatpush1.bf16.msra.mxu0 0
      %662 = vmatprep.mubr.bf16.mxu0 0
      %663 = vmatmul.mubr.bf16.gmra.mrb[0].mxu0 %v625
      %v664 = vpop.f32.mrb[0].mxu0
      %v665 = vadd.f32 %v618, %v664
      %v666 = vpop.f32.mrb[0].mxu0
      %v667 = vpop.f32.mrb[0].mxu0
      %v668 = vadd.f32 %v621, %v667
      %v669 = vpop.f32.mrb[0].mxu0
      %670 = vdwg.mxu0
      %v671 = vadd.f32 %v665, %v517
      %v672 = vadd.f32 %v668, %v520
      %v673 = vtanh.pop %v671
      %v674 = vtanh.pop %v672
      %v675 = vpack.c.bf16 %v674, %v673
      %v677 = vlaneseq
      %v678 = vshrl.u32 %v677, 7
      %v679 = vsub.s32 0, %v678
      %v680 = vrot.slane %v464, %v679
      %v698 = vunpack.c.l.b16 %v448
      %v699 = vunpack.c.l.b16 %v449
      %v700 = vunpack.c.l.b16 %v450
      %v701 = vunpack.c.l.b16 %v451
      %v702 = vunpack.c.l.b16 %v452
      %v703 = vunpack.c.l.b16 %v453
      %v704 = vunpack.c.l.b16 %v454
      %v705 = vunpack.c.l.b16 %v455
      %v706 = vunpack.c.l.b16 %v456
      %v707 = vunpack.c.l.b16 %v457
      %v708 = vunpack.c.l.b16 %v458
      %v709 = vunpack.c.l.b16 %v459
      %v710 = vunpack.c.l.b16 %v460
      %v711 = vunpack.c.l.b16 %v461
      %v712 = vunpack.c.l.b16 %v462
      %v713 = vunpack.c.l.b16 %v463
      %v714 = vpack.c.b16 %v699, %v698
      %v715 = vpack.c.b16 %v701, %v700
      %v716 = vpack.c.b16 %v703, %v702
      %v717 = vpack.c.b16 %v705, %v704
      %v718 = vpack.c.b16 %v707, %v706
      %v719 = vpack.c.b16 %v709, %v708
      %v720 = vpack.c.b16 %v711, %v710
      %v721 = vpack.c.b16 %v713, %v712
      %730 = vmatprep.subr.bf16.mxu0 0
      %731 = vmatpush1.bf16.msra.mxu0 %v714
      %732 = vmatprep.subr.bf16.mxu0 0
      %733 = vmatpush1.bf16.msra.mxu0 %v715
      %734 = vmatprep.subr.bf16.mxu0 0
      %735 = vmatpush1.bf16.msra.mxu0 %v716
      %736 = vmatprep.subr.bf16.mxu0 0
      %737 = vmatpush1.bf16.msra.mxu0 %v717
      %738 = vmatprep.subr.bf16.mxu0 0
      %739 = vmatpush1.bf16.msra.mxu0 %v718
      %740 = vmatprep.subr.bf16.mxu0 0
      %741 = vmatpush1.bf16.msra.mxu0 %v719
      %742 = vmatprep.subr.bf16.mxu0 0
      %743 = vmatpush1.bf16.msra.mxu0 %v720
      %744 = vmatprep.subr.bf16.mxu0 0
      %745 = vmatpush1.bf16.msra.mxu0 %v721
      %746 = vmatprep.subr.bf16.mxu0 0
      %747 = vmatpush1.bf16.msra.mxu0 0
      %748 = vmatprep.subr.bf16.mxu0 0
      %749 = vmatpush1.bf16.msra.mxu0 0
      %750 = vmatprep.subr.bf16.mxu0 0
      %751 = vmatpush1.bf16.msra.mxu0 0
      %752 = vmatprep.subr.bf16.mxu0 0
      %753 = vmatpush1.bf16.msra.mxu0 0
      %754 = vmatprep.subr.bf16.mxu0 0
      %755 = vmatpush1.bf16.msra.mxu0 0
      %756 = vmatprep.subr.bf16.mxu0 0
      %757 = vmatpush1.bf16.msra.mxu0 0
      %758 = vmatprep.subr.bf16.mxu0 0
      %759 = vmatpush1.bf16.msra.mxu0 0
      %760 = vmatprep.subr.bf16.mxu0 0
      %761 = vmatpush1.bf16.msra.mxu0 0
      %762 = vmatprep.mubr.bf16.mxu0 0
      %763 = vmatmul.mubr.bf16.gmra.mrb[0].mxu0 %v675
      %v764 = vpop.f32.mrb[0].mxu0
      %v765 = vadd.f32 %v680, %v764
      %v766 = vpop.f32.mrb[0].mxu0
      %v767 = vpop.f32.mrb[0].mxu0
      %v768 = vadd.f32 %v680, %v767
      %v769 = vpop.f32.mrb[0].mxu0
      %770 = vdwg.mxu0
      %v771 = vmul.f32 %v765, 0.5
      %v772 = vmul.f32 %v768, 0.5
      %v773 = vmul.f32 %v771, %v435
      %v774 = vmul.f32 %v772, %v440
      %v775 = vadd.f32 %v428, %v773
      %v776 = vadd.f32 %v429, %v774
      %v777 = vpack.c.bf16 %v776, %v775
      %778 = vmatprep.subr.bf16.mxu0 0
      %779 = vmatpush1.bf16.msra.mxu0 %v777
      %780 = vmatprep.subr.bf16.mxu0 0
      %781 = vmatpush1.bf16.msra.mxu0 0
      %782 = vmatprep.subr.bf16.mxu0 0
      %783 = vmatpush1.bf16.msra.mxu0 0
      %784 = vmatprep.subr.bf16.mxu0 0
      %785 = vmatpush1.bf16.msra.mxu0 0
      %786 = vmatprep.subr.bf16.mxu0 0
      %787 = vmatpush1.bf16.msra.mxu0 0
      %788 = vmatprep.subr.bf16.mxu0 0
      %789 = vmatpush1.bf16.msra.mxu0 0
      %790 = vmatprep.subr.bf16.mxu0 0
      %791 = vmatpush1.bf16.msra.mxu0 0
      %792 = vmatprep.subr.bf16.mxu0 0
      %793 = vmatpush1.bf16.msra.mxu0 0
      %794 = vmatprep.subr.bf16.mxu0 0
      %795 = vmatpush1.bf16.msra.mxu0 0
      %796 = vmatprep.subr.bf16.mxu0 0
      %797 = vmatpush1.bf16.msra.mxu0 0
      %798 = vmatprep.subr.bf16.mxu0 0
      %799 = vmatpush1.bf16.msra.mxu0 0
      %800 = vmatprep.subr.bf16.mxu0 0
      %801 = vmatpush1.bf16.msra.mxu0 0
      %802 = vmatprep.subr.bf16.mxu0 0
      %803 = vmatpush1.bf16.msra.mxu0 0
      %804 = vmatprep.subr.bf16.mxu0 0
      %805 = vmatpush1.bf16.msra.mxu0 0
      %806 = vmatprep.subr.bf16.mxu0 0
      %807 = vmatpush1.bf16.msra.mxu0 0
      %808 = vmatprep.subr.bf16.mxu0 0
      %809 = vmatpush1.bf16.msra.mxu0 0
      %810 = vmatprep.mubr.bf16.mxu0 0
      %811 = vmatmul.mubr.bf16.gmra.mrb[0].mxu0 %v531
      %v812 = vpop.f32.mrb[0].mxu0
      %v813 = vadd.f32 0.0, %v812
      %v814 = vpop.f32.mrb[0].mxu0
      %v815 = vpop.f32.mrb[0].mxu0
      %v816 = vadd.f32 0.0, %v815
      %v817 = vpop.f32.mrb[0].mxu0
      %818 = vdwg.mxu0
      %v819 = vpack.c.bf16 %v816, %v813
      %v821 = vsel %vm575, %v819, 0
      %823 = vmatprep.subr.bf16.mxu0 0
      %824 = vmatpush1.bf16.msra.mxu0 %v581
      %825 = vmatprep.subr.bf16.mxu0 0
      %826 = vmatpush1.bf16.msra.mxu0 0
      %827 = vmatprep.subr.bf16.mxu0 0
      %828 = vmatpush1.bf16.msra.mxu0 0
      %829 = vmatprep.subr.bf16.mxu0 0
      %830 = vmatpush1.bf16.msra.mxu0 0
      %831 = vmatprep.subr.bf16.mxu0 0
      %832 = vmatpush1.bf16.msra.mxu0 0
      %833 = vmatprep.subr.bf16.mxu0 0
      %834 = vmatpush1.bf16.msra.mxu0 0
      %835 = vmatprep.subr.bf16.mxu0 0
      %836 = vmatpush1.bf16.msra.mxu0 0
      %837 = vmatprep.subr.bf16.mxu0 0
      %838 = vmatpush1.bf16.msra.mxu0 0
      %839 = vmatprep.subr.bf16.mxu0 0
      %840 = vmatpush1.bf16.msra.mxu0 0
      %841 = vmatprep.subr.bf16.mxu0 0
      %842 = vmatpush1.bf16.msra.mxu0 0
      %843 = vmatprep.subr.bf16.mxu0 0
      %844 = vmatpush1.bf16.msra.mxu0 0
      %845 = vmatprep.subr.bf16.mxu0 0
      %846 = vmatpush1.bf16.msra.mxu0 0
      %847 = vmatprep.subr.bf16.mxu0 0
      %848 = vmatpush1.bf16.msra.mxu0 0
      %849 = vmatprep.subr.bf16.mxu0 0
      %850 = vmatpush1.bf16.msra.mxu0 0
      %851 = vmatprep.subr.bf16.mxu0 0
      %852 = vmatpush1.bf16.msra.mxu0 0
      %853 = vmatprep.subr.bf16.mxu0 0
      %854 = vmatpush1.bf16.msra.mxu0 0
      %855 = vmatprep.mubr.bf16.mxu0 0
      %856 = vmatmul.mubr.bf16.gmra.mrb[0].mxu0 %v821
      %v857 = vpop.f32.mrb[0].mxu0
      %v858 = vadd.f32 0.0, %v857
      %v859 = vpop.f32.mrb[0].mxu0
      %v860 = vpop.f32.mrb[0].mxu0
      %v861 = vadd.f32 0.0, %v860
      %v862 = vpop.f32.mrb[0].mxu0
      %863 = vdwg.mxu0
      %v865 = vsel %vm575, %v777, 0
      %867 = vmatprep.subr.bf16.mxu0 0
      %868 = vmatpush1.bf16.msra.mxu0 %v628
      %869 = vmatprep.subr.bf16.mxu0 0
      %870 = vmatpush1.bf16.msra.mxu0 0
      %871 = vmatprep.subr.bf16.mxu0 0
      %872 = vmatpush1.bf16.msra.mxu0 0
      %873 = vmatprep.subr.bf16.mxu0 0
      %874 = vmatpush1.bf16.msra.mxu0 0
      %875 = vmatprep.subr.bf16.mxu0 0
      %876 = vmatpush1.bf16.msra.mxu0 0
      %877 = vmatprep.subr.bf16.mxu0 0
      %878 = vmatpush1.bf16.msra.mxu0 0
      %879 = vmatprep.subr.bf16.mxu0 0
      %880 = vmatpush1.bf16.msra.mxu0 0
      %881 = vmatprep.subr.bf16.mxu0 0
      %882 = vmatpush1.bf16.msra.mxu0 0
      %883 = vmatprep.subr.bf16.mxu0 0
      %884 = vmatpush1.bf16.msra.mxu0 0
      %885 = vmatprep.subr.bf16.mxu0 0
      %886 = vmatpush1.bf16.msra.mxu0 0
      %887 = vmatprep.subr.bf16.mxu0 0
      %888 = vmatpush1.bf16.msra.mxu0 0
      %889 = vmatprep.subr.bf16.mxu0 0
      %890 = vmatpush1.bf16.msra.mxu0 0
      %891 = vmatprep.subr.bf16.mxu0 0
      %892 = vmatpush1.bf16.msra.mxu0 0
      %893 = vmatprep.subr.bf16.mxu0 0
      %894 = vmatpush1.bf16.msra.mxu0 0
      %895 = vmatprep.subr.bf16.mxu0 0
      %896 = vmatpush1.bf16.msra.mxu0 0
      %897 = vmatprep.subr.bf16.mxu0 0
      %898 = vmatpush1.bf16.msra.mxu0 0
      %899 = vmatprep.mubr.bf16.mxu0 0
      %900 = vmatmul.mubr.bf16.gmra.mrb[0].mxu0 %v865
      %v901 = vpop.f32.mrb[0].mxu0
      %v902 = vadd.f32 %v858, %v901
      %v903 = vpop.f32.mrb[0].mxu0
      %v904 = vpop.f32.mrb[0].mxu0
      %v905 = vadd.f32 %v861, %v904
      %v906 = vpop.f32.mrb[0].mxu0
      %907 = vdwg.mxu0
      %v908 = vadd.f32 %v902, %v517
      %v909 = vadd.f32 %v905, %v520
      %v910 = vtanh.pop %v908
      %v911 = vtanh.pop %v909
      %v912 = vpack.c.bf16 %v911, %v910
      %913 = vmatprep.subr.bf16.mxu0 0
      %914 = vmatpush1.bf16.msra.mxu0 %v714
      %915 = vmatprep.subr.bf16.mxu0 0
      %916 = vmatpush1.bf16.msra.mxu0 %v715
      %917 = vmatprep.subr.bf16.mxu0 0
      %918 = vmatpush1.bf16.msra.mxu0 %v716
      %919 = vmatprep.subr.bf16.mxu0 0
      %920 = vmatpush1.bf16.msra.mxu0 %v717
      %921 = vmatprep.subr.bf16.mxu0 0
      %922 = vmatpush1.bf16.msra.mxu0 %v718
      %923 = vmatprep.subr.bf16.mxu0 0
      %924 = vmatpush1.bf16.msra.mxu0 %v719
      %925 = vmatprep.subr.bf16.mxu0 0
      %926 = vmatpush1.bf16.msra.mxu0 %v720
      %927 = vmatprep.subr.bf16.mxu0 0
      %928 = vmatpush1.bf16.msra.mxu0 %v721
      %929 = vmatprep.subr.bf16.mxu0 0
      %930 = vmatpush1.bf16.msra.mxu0 0
      %931 = vmatprep.subr.bf16.mxu0 0
      %932 = vmatpush1.bf16.msra.mxu0 0
      %933 = vmatprep.subr.bf16.mxu0 0
      %934 = vmatpush1.bf16.msra.mxu0 0
      %935 = vmatprep.subr.bf16.mxu0 0
      %936 = vmatpush1.bf16.msra.mxu0 0
      %937 = vmatprep.subr.bf16.mxu0 0
      %938 = vmatpush1.bf16.msra.mxu0 0
      %939 = vmatprep.subr.bf16.mxu0 0
      %940 = vmatpush1.bf16.msra.mxu0 0
      %941 = vmatprep.subr.bf16.mxu0 0
      %942 = vmatpush1.bf16.msra.mxu0 0
      %943 = vmatprep.subr.bf16.mxu0 0
      %944 = vmatpush1.bf16.msra.mxu0 0
      %945 = vmatprep.mubr.bf16.mxu0 0
      %946 = vmatmul.mubr.bf16.gmra.mrb[0].mxu0 %v912
      %v947 = vpop.f32.mrb[0].mxu0
      %v948 = vadd.f32 %v680, %v947
      %v949 = vpop.f32.mrb[0].mxu0
      %v950 = vpop.f32.mrb[0].mxu0
      %v951 = vadd.f32 %v680, %v950
      %v952 = vpop.f32.mrb[0].mxu0
      %953 = vdwg.mxu0
      %v954 = vmul.f32 %v948, 2.0
      %v955 = vmul.f32 %v951, 2.0
      %v956 = vadd.f32 %v765, %v954
      %v957 = vadd.f32 %v768, %v955
      %v958 = vmul.f32 %v948, 0.5
      %v959 = vmul.f32 %v951, 0.5
      %v960 = vmul.f32 %v958, %v435
      %v961 = vmul.f32 %v959, %v440
      %v962 = vadd.f32 %v428, %v960
      %v963 = vadd.f32 %v429, %v961
      %v964 = vpack.c.bf16 %v963, %v962
      %965 = vmatprep.subr.bf16.mxu0 0
      %966 = vmatpush1.bf16.msra.mxu0 %v964
      %967 = vmatprep.subr.bf16.mxu0 0
      %968 = vmatpush1.bf16.msra.mxu0 0
      %969 = vmatprep.subr.bf16.mxu0 0
      %970 = vmatpush1.bf16.msra.mxu0 0
      %971 = vmatprep.subr.bf16.mxu0 0
      %972 = vmatpush1.bf16.msra.mxu0 0
      %973 = vmatprep.subr.bf16.mxu0 0
      %974 = vmatpush1.bf16.msra.mxu0 0
      %975 = vmatprep.subr.bf16.mxu0 0
      %976 = vmatpush1.bf16.msra.mxu0 0
      %977 = vmatprep.subr.bf16.mxu0 0
      %978 = vmatpush1.bf16.msra.mxu0 0
      %979 = vmatprep.subr.bf16.mxu0 0
      %980 = vmatpush1.bf16.msra.mxu0 0
      %981 = vmatprep.subr.bf16.mxu0 0
      %982 = vmatpush1.bf16.msra.mxu0 0
      %983 = vmatprep.subr.bf16.mxu0 0
      %984 = vmatpush1.bf16.msra.mxu0 0
      %985 = vmatprep.subr.bf16.mxu0 0
      %986 = vmatpush1.bf16.msra.mxu0 0
      %987 = vmatprep.subr.bf16.mxu0 0
      %988 = vmatpush1.bf16.msra.mxu0 0
      %989 = vmatprep.subr.bf16.mxu0 0
      %990 = vmatpush1.bf16.msra.mxu0 0
      %991 = vmatprep.subr.bf16.mxu0 0
      %992 = vmatpush1.bf16.msra.mxu0 0
      %993 = vmatprep.subr.bf16.mxu0 0
      %994 = vmatpush1.bf16.msra.mxu0 0
      %995 = vmatprep.subr.bf16.mxu0 0
      %996 = vmatpush1.bf16.msra.mxu0 0
      %997 = vmatprep.mubr.bf16.mxu0 0
      %998 = vmatmul.mubr.bf16.gmra.mrb[0].mxu0 %v531
      %v999 = vpop.f32.mrb[0].mxu0
      %v1000 = vadd.f32 0.0, %v999
      %v1001 = vpop.f32.mrb[0].mxu0
      %v1002 = vpop.f32.mrb[0].mxu0
      %v1003 = vadd.f32 0.0, %v1002
      %v1004 = vpop.f32.mrb[0].mxu0
      %1005 = vdwg.mxu0
      %v1006 = vpack.c.bf16 %v1003, %v1000
      %v1008 = vsel %vm575, %v1006, 0
      %1010 = vmatprep.subr.bf16.mxu0 0
      %1011 = vmatpush1.bf16.msra.mxu0 %v581
      %1012 = vmatprep.subr.bf16.mxu0 0
      %1013 = vmatpush1.bf16.msra.mxu0 0
      %1014 = vmatprep.subr.bf16.mxu0 0
      %1015 = vmatpush1.bf16.msra.mxu0 0
      %1016 = vmatprep.subr.bf16.mxu0 0
      %1017 = vmatpush1.bf16.msra.mxu0 0
      %1018 = vmatprep.subr.bf16.mxu0 0
      %1019 = vmatpush1.bf16.msra.mxu0 0
      %1020 = vmatprep.subr.bf16.mxu0 0
      %1021 = vmatpush1.bf16.msra.mxu0 0
      %1022 = vmatprep.subr.bf16.mxu0 0
      %1023 = vmatpush1.bf16.msra.mxu0 0
      %1024 = vmatprep.subr.bf16.mxu0 0
      %1025 = vmatpush1.bf16.msra.mxu0 0
      %1026 = vmatprep.subr.bf16.mxu0 0
      %1027 = vmatpush1.bf16.msra.mxu0 0
      %1028 = vmatprep.subr.bf16.mxu0 0
      %1029 = vmatpush1.bf16.msra.mxu0 0
      %1030 = vmatprep.subr.bf16.mxu0 0
      %1031 = vmatpush1.bf16.msra.mxu0 0
      %1032 = vmatprep.subr.bf16.mxu0 0
      %1033 = vmatpush1.bf16.msra.mxu0 0
      %1034 = vmatprep.subr.bf16.mxu0 0
      %1035 = vmatpush1.bf16.msra.mxu0 0
      %1036 = vmatprep.subr.bf16.mxu0 0
      %1037 = vmatpush1.bf16.msra.mxu0 0
      %1038 = vmatprep.subr.bf16.mxu0 0
      %1039 = vmatpush1.bf16.msra.mxu0 0
      %1040 = vmatprep.subr.bf16.mxu0 0
      %1041 = vmatpush1.bf16.msra.mxu0 0
      %1042 = vmatprep.mubr.bf16.mxu0 0
      %1043 = vmatmul.mubr.bf16.gmra.mrb[0].mxu0 %v1008
      %v1044 = vpop.f32.mrb[0].mxu0
      %v1045 = vadd.f32 0.0, %v1044
      %v1046 = vpop.f32.mrb[0].mxu0
      %v1047 = vpop.f32.mrb[0].mxu0
      %v1048 = vadd.f32 0.0, %v1047
      %v1049 = vpop.f32.mrb[0].mxu0
      %1050 = vdwg.mxu0
      %v1052 = vsel %vm575, %v964, 0
      %1054 = vmatprep.subr.bf16.mxu0 0
      %1055 = vmatpush1.bf16.msra.mxu0 %v628
      %1056 = vmatprep.subr.bf16.mxu0 0
      %1057 = vmatpush1.bf16.msra.mxu0 0
      %1058 = vmatprep.subr.bf16.mxu0 0
      %1059 = vmatpush1.bf16.msra.mxu0 0
      %1060 = vmatprep.subr.bf16.mxu0 0
      %1061 = vmatpush1.bf16.msra.mxu0 0
      %1062 = vmatprep.subr.bf16.mxu0 0
      %1063 = vmatpush1.bf16.msra.mxu0 0
      %1064 = vmatprep.subr.bf16.mxu0 0
      %1065 = vmatpush1.bf16.msra.mxu0 0
      %1066 = vmatprep.subr.bf16.mxu0 0
      %1067 = vmatpush1.bf16.msra.mxu0 0
      %1068 = vmatprep.subr.bf16.mxu0 0
      %1069 = vmatpush1.bf16.msra.mxu0 0
      %1070 = vmatprep.subr.bf16.mxu0 0
      %1071 = vmatpush1.bf16.msra.mxu0 0
      %1072 = vmatprep.subr.bf16.mxu0 0
      %1073 = vmatpush1.bf16.msra.mxu0 0
      %1074 = vmatprep.subr.bf16.mxu0 0
      %1075 = vmatpush1.bf16.msra.mxu0 0
      %1076 = vmatprep.subr.bf16.mxu0 0
      %1077 = vmatpush1.bf16.msra.mxu0 0
      %1078 = vmatprep.subr.bf16.mxu0 0
      %1079 = vmatpush1.bf16.msra.mxu0 0
      %1080 = vmatprep.subr.bf16.mxu0 0
      %1081 = vmatpush1.bf16.msra.mxu0 0
      %1082 = vmatprep.subr.bf16.mxu0 0
      %1083 = vmatpush1.bf16.msra.mxu0 0
      %1084 = vmatprep.subr.bf16.mxu0 0
      %1085 = vmatpush1.bf16.msra.mxu0 0
      %1086 = vmatprep.mubr.bf16.mxu0 0
      %1087 = vmatmul.mubr.bf16.gmra.mrb[0].mxu0 %v1052
      %v1088 = vpop.f32.mrb[0].mxu0
      %v1089 = vadd.f32 %v1045, %v1088
      %v1090 = vpop.f32.mrb[0].mxu0
      %v1091 = vpop.f32.mrb[0].mxu0
      %v1092 = vadd.f32 %v1048, %v1091
      %v1093 = vpop.f32.mrb[0].mxu0
      %1094 = vdwg.mxu0
      %v1095 = vadd.f32 %v1089, %v517
      %v1096 = vadd.f32 %v1092, %v520
      %v1097 = vtanh.pop %v1095
      %v1098 = vtanh.pop %v1096
      %v1099 = vpack.c.bf16 %v1098, %v1097
      %1100 = vmatprep.subr.bf16.mxu0 0
      %1101 = vmatpush1.bf16.msra.mxu0 %v714
      %1102 = vmatprep.subr.bf16.mxu0 0
      %1103 = vmatpush1.bf16.msra.mxu0 %v715
      %1104 = vmatprep.subr.bf16.mxu0 0
      %1105 = vmatpush1.bf16.msra.mxu0 %v716
      %1106 = vmatprep.subr.bf16.mxu0 0
      %1107 = vmatpush1.bf16.msra.mxu0 %v717
      %1108 = vmatprep.subr.bf16.mxu0 0
      %1109 = vmatpush1.bf16.msra.mxu0 %v718
      %1110 = vmatprep.subr.bf16.mxu0 0
      %1111 = vmatpush1.bf16.msra.mxu0 %v719
      %1112 = vmatprep.subr.bf16.mxu0 0
      %1113 = vmatpush1.bf16.msra.mxu0 %v720
      %1114 = vmatprep.subr.bf16.mxu0 0
      %1115 = vmatpush1.bf16.msra.mxu0 %v721
      %1116 = vmatprep.subr.bf16.mxu0 0
      %1117 = vmatpush1.bf16.msra.mxu0 0
      %1118 = vmatprep.subr.bf16.mxu0 0
      %1119 = vmatpush1.bf16.msra.mxu0 0
      %1120 = vmatprep.subr.bf16.mxu0 0
      %1121 = vmatpush1.bf16.msra.mxu0 0
      %1122 = vmatprep.subr.bf16.mxu0 0
      %1123 = vmatpush1.bf16.msra.mxu0 0
      %1124 = vmatprep.subr.bf16.mxu0 0
      %1125 = vmatpush1.bf16.msra.mxu0 0
      %1126 = vmatprep.subr.bf16.mxu0 0
      %1127 = vmatpush1.bf16.msra.mxu0 0
      %1128 = vmatprep.subr.bf16.mxu0 0
      %1129 = vmatpush1.bf16.msra.mxu0 0
      %1130 = vmatprep.subr.bf16.mxu0 0
      %1131 = vmatpush1.bf16.msra.mxu0 0
      %1132 = vmatprep.mubr.bf16.mxu0 0
      %1133 = vmatmul.mubr.bf16.gmra.mrb[0].mxu0 %v1099
      %v1134 = vpop.f32.mrb[0].mxu0
      %v1135 = vadd.f32 %v680, %v1134
      %v1136 = vpop.f32.mrb[0].mxu0
      %v1137 = vpop.f32.mrb[0].mxu0
      %v1138 = vadd.f32 %v680, %v1137
      %v1139 = vpop.f32.mrb[0].mxu0
      %1140 = vdwg.mxu0
      %v1141 = vmul.f32 %v1135, 2.0
      %v1142 = vmul.f32 %v1138, 2.0
      %v1143 = vadd.f32 %v956, %v1141
      %v1144 = vadd.f32 %v957, %v1142
      %v1145 = vmul.f32 %v1135, %v435
      %v1146 = vmul.f32 %v1138, %v440
      %v1147 = vadd.f32 %v428, %v1145
      %v1148 = vadd.f32 %v429, %v1146
      %v1149 = vpack.c.bf16 %v1148, %v1147
      %1150 = vmatprep.subr.bf16.mxu0 0
      %1151 = vmatpush1.bf16.msra.mxu0 %v1149
      %1152 = vmatprep.subr.bf16.mxu0 0
      %1153 = vmatpush1.bf16.msra.mxu0 0
      %1154 = vmatprep.subr.bf16.mxu0 0
      %1155 = vmatpush1.bf16.msra.mxu0 0
      %1156 = vmatprep.subr.bf16.mxu0 0
      %1157 = vmatpush1.bf16.msra.mxu0 0
      %1158 = vmatprep.subr.bf16.mxu0 0
      %1159 = vmatpush1.bf16.msra.mxu0 0
      %1160 = vmatprep.subr.bf16.mxu0 0
      %1161 = vmatpush1.bf16.msra.mxu0 0
      %1162 = vmatprep.subr.bf16.mxu0 0
      %1163 = vmatpush1.bf16.msra.mxu0 0
      %1164 = vmatprep.subr.bf16.mxu0 0
      %1165 = vmatpush1.bf16.msra.mxu0 0
      %1166 = vmatprep.subr.bf16.mxu0 0
      %1167 = vmatpush1.bf16.msra.mxu0 0
      %1168 = vmatprep.subr.bf16.mxu0 0
      %1169 = vmatpush1.bf16.msra.mxu0 0
      %1170 = vmatprep.subr.bf16.mxu0 0
      %1171 = vmatpush1.bf16.msra.mxu0 0
      %1172 = vmatprep.subr.bf16.mxu0 0
      %1173 = vmatpush1.bf16.msra.mxu0 0
      %1174 = vmatprep.subr.bf16.mxu0 0
      %1175 = vmatpush1.bf16.msra.mxu0 0
      %1176 = vmatprep.subr.bf16.mxu0 0
      %1177 = vmatpush1.bf16.msra.mxu0 0
      %1178 = vmatprep.subr.bf16.mxu0 0
      %1179 = vmatpush1.bf16.msra.mxu0 0
      %1180 = vmatprep.subr.bf16.mxu0 0
      %1181 = vmatpush1.bf16.msra.mxu0 0
      %1182 = vmatprep.mubr.bf16.mxu0 0
      %1183 = vmatmul.mubr.bf16.gmra.mrb[0].mxu0 %v531
      %v1184 = vpop.f32.mrb[0].mxu0
      %v1185 = vadd.f32 0.0, %v1184
      %v1186 = vpop.f32.mrb[0].mxu0
      %v1187 = vpop.f32.mrb[0].mxu0
      %v1188 = vadd.f32 0.0, %v1187
      %v1189 = vpop.f32.mrb[0].mxu0
      %1190 = vdwg.mxu0
      %v1191 = vpack.c.bf16 %v1188, %v1185
      %v1193 = vsel %vm575, %v1191, 0
      %1195 = vmatprep.subr.bf16.mxu0 0
      %1196 = vmatpush1.bf16.msra.mxu0 %v581
      %1197 = vmatprep.subr.bf16.mxu0 0
      %1198 = vmatpush1.bf16.msra.mxu0 0
      %1199 = vmatprep.subr.bf16.mxu0 0
      %1200 = vmatpush1.bf16.msra.mxu0 0
      %1201 = vmatprep.subr.bf16.mxu0 0
      %1202 = vmatpush1.bf16.msra.mxu0 0
      %1203 = vmatprep.subr.bf16.mxu0 0
      %1204 = vmatpush1.bf16.msra.mxu0 0
      %1205 = vmatprep.subr.bf16.mxu0 0
      %1206 = vmatpush1.bf16.msra.mxu0 0
      %1207 = vmatprep.subr.bf16.mxu0 0
      %1208 = vmatpush1.bf16.msra.mxu0 0
      %1209 = vmatprep.subr.bf16.mxu0 0
      %1210 = vmatpush1.bf16.msra.mxu0 0
      %1211 = vmatprep.subr.bf16.mxu0 0
      %1212 = vmatpush1.bf16.msra.mxu0 0
      %1213 = vmatprep.subr.bf16.mxu0 0
      %1214 = vmatpush1.bf16.msra.mxu0 0
      %1215 = vmatprep.subr.bf16.mxu0 0
      %1216 = vmatpush1.bf16.msra.mxu0 0
      %1217 = vmatprep.subr.bf16.mxu0 0
      %1218 = vmatpush1.bf16.msra.mxu0 0
      %1219 = vmatprep.subr.bf16.mxu0 0
      %1220 = vmatpush1.bf16.msra.mxu0 0
      %1221 = vmatprep.subr.bf16.mxu0 0
      %1222 = vmatpush1.bf16.msra.mxu0 0
      %1223 = vmatprep.subr.bf16.mxu0 0
      %1224 = vmatpush1.bf16.msra.mxu0 0
      %1225 = vmatprep.subr.bf16.mxu0 0
      %1226 = vmatpush1.bf16.msra.mxu0 0
      %1227 = vmatprep.mubr.bf16.mxu0 0
      %1228 = vmatmul.mubr.bf16.gmra.mrb[0].mxu0 %v1193
      %v1229 = vpop.f32.mrb[0].mxu0
      %v1230 = vadd.f32 0.0, %v1229
      %v1231 = vpop.f32.mrb[0].mxu0
      %v1232 = vpop.f32.mrb[0].mxu0
      %v1233 = vadd.f32 0.0, %v1232
      %v1234 = vpop.f32.mrb[0].mxu0
      %1235 = vdwg.mxu0
      %v1237 = vsel %vm575, %v1149, 0
      %1239 = vmatprep.subr.bf16.mxu0 0
      %1240 = vmatpush1.bf16.msra.mxu0 %v628
      %1241 = vmatprep.subr.bf16.mxu0 0
      %1242 = vmatpush1.bf16.msra.mxu0 0
      %1243 = vmatprep.subr.bf16.mxu0 0
      %1244 = vmatpush1.bf16.msra.mxu0 0
      %1245 = vmatprep.subr.bf16.mxu0 0
      %1246 = vmatpush1.bf16.msra.mxu0 0
      %1247 = vmatprep.subr.bf16.mxu0 0
      %1248 = vmatpush1.bf16.msra.mxu0 0
      %1249 = vmatprep.subr.bf16.mxu0 0
      %1250 = vmatpush1.bf16.msra.mxu0 0
      %1251 = vmatprep.subr.bf16.mxu0 0
      %1252 = vmatpush1.bf16.msra.mxu0 0
      %1253 = vmatprep.subr.bf16.mxu0 0
      %1254 = vmatpush1.bf16.msra.mxu0 0
      %1255 = vmatprep.subr.bf16.mxu0 0
      %1256 = vmatpush1.bf16.msra.mxu0 0
      %1257 = vmatprep.subr.bf16.mxu0 0
      %1258 = vmatpush1.bf16.msra.mxu0 0
      %1259 = vmatprep.subr.bf16.mxu0 0
      %1260 = vmatpush1.bf16.msra.mxu0 0
      %1261 = vmatprep.subr.bf16.mxu0 0
      %1262 = vmatpush1.bf16.msra.mxu0 0
      %1263 = vmatprep.subr.bf16.mxu0 0
      %1264 = vmatpush1.bf16.msra.mxu0 0
      %1265 = vmatprep.subr.bf16.mxu0 0
      %1266 = vmatpush1.bf16.msra.mxu0 0
      %1267 = vmatprep.subr.bf16.mxu0 0
      %1268 = vmatpush1.bf16.msra.mxu0 0
      %1269 = vmatprep.subr.bf16.mxu0 0
      %1270 = vmatpush1.bf16.msra.mxu0 0
      %1271 = vmatprep.mubr.bf16.mxu0 0
      %1272 = vmatmul.mubr.bf16.gmra.mrb[0].mxu0 %v1237
      %v1273 = vpop.f32.mrb[0].mxu0
      %v1274 = vadd.f32 %v1230, %v1273
      %v1275 = vpop.f32.mrb[0].mxu0
      %v1276 = vpop.f32.mrb[0].mxu0
      %v1277 = vadd.f32 %v1233, %v1276
      %v1278 = vpop.f32.mrb[0].mxu0
      %1279 = vdwg.mxu0
      %v1280 = vadd.f32 %v1274, %v517
      %v1281 = vadd.f32 %v1277, %v520
      %v1282 = vtanh.pop %v1280
      %v1283 = vtanh.pop %v1281
      %v1284 = vpack.c.bf16 %v1283, %v1282
      %1285 = vmatprep.subr.bf16.mxu0 0
      %1286 = vmatpush1.bf16.msra.mxu0 %v714
      %1287 = vmatprep.subr.bf16.mxu0 0
      %1288 = vmatpush1.bf16.msra.mxu0 %v715
      %1289 = vmatprep.subr.bf16.mxu0 0
      %1290 = vmatpush1.bf16.msra.mxu0 %v716
      %1291 = vmatprep.subr.bf16.mxu0 0
      %1292 = vmatpush1.bf16.msra.mxu0 %v717
      %1293 = vmatprep.subr.bf16.mxu0 0
      %1294 = vmatpush1.bf16.msra.mxu0 %v718
      %1295 = vmatprep.subr.bf16.mxu0 0
      %1296 = vmatpush1.bf16.msra.mxu0 %v719
      %1297 = vmatprep.subr.bf16.mxu0 0
      %1298 = vmatpush1.bf16.msra.mxu0 %v720
      %1299 = vmatprep.subr.bf16.mxu0 0
      %1300 = vmatpush1.bf16.msra.mxu0 %v721
      %1301 = vmatprep.subr.bf16.mxu0 0
      %1302 = vmatpush1.bf16.msra.mxu0 0
      %1303 = vmatprep.subr.bf16.mxu0 0
      %1304 = vmatpush1.bf16.msra.mxu0 0
      %1305 = vmatprep.subr.bf16.mxu0 0
      %1306 = vmatpush1.bf16.msra.mxu0 0
      %1307 = vmatprep.subr.bf16.mxu0 0
      %1308 = vmatpush1.bf16.msra.mxu0 0
      %1309 = vmatprep.subr.bf16.mxu0 0
      %1310 = vmatpush1.bf16.msra.mxu0 0
      %1311 = vmatprep.subr.bf16.mxu0 0
      %1312 = vmatpush1.bf16.msra.mxu0 0
      %1313 = vmatprep.subr.bf16.mxu0 0
      %1314 = vmatpush1.bf16.msra.mxu0 0
      %1315 = vmatprep.subr.bf16.mxu0 0
      %1316 = vmatpush1.bf16.msra.mxu0 0
      %1317 = vmatprep.mubr.bf16.mxu0 0
      %1318 = vmatmul.mubr.bf16.gmra.mrb[0].mxu0 %v1284
      %v1319 = vpop.f32.mrb[0].mxu0
      %v1320 = vadd.f32 %v680, %v1319
      %v1321 = vpop.f32.mrb[0].mxu0
      %v1322 = vpop.f32.mrb[0].mxu0
      %v1323 = vadd.f32 %v680, %v1322
      %v1324 = vpop.f32.mrb[0].mxu0
      %1325 = vdwg.mxu0
      %v1326 = vadd.f32 %v1143, %v1320
      %v1327 = vadd.f32 %v1144, %v1323
      %v1328 = vmul.f32 %v1326, 0.16666667
      %v1329 = vmul.f32 %v1327, 0.16666667
      %1330 = vst.msk [vmem:[%s425] sm:$0xff] %vm575, %v1328
      %1331 = vst.msk [vmem:[%s425 + $0x8] sm:$0xff] %vm575, %v1329
      %s1332 = smul.u32 2, %s21
      %p1333 = scmp.lt.s32.totalorder %s1332, 3
      %s1334 = scalar_select %p1333, %s1332, 3
      %s1335 = smul.addr %s1334, 8
      %s1336 = scalar_lea.vmem %s10, %s1335
      // Predicated region
      $region61: #{tpu_custom_call.1} parent=59 // pred_check
        %p1337 = pneg %p269
      $region62: #{tpu_custom_call.1} parent=59 // pred_check_branch
        %1339 = sbr.rel (%p1337) target = $region64
      $region63: #{tpu_custom_call.1} parent=59 // pred_region
        %s1340 = smul.u32 2, %s21
      $region64: #{tpu_custom_call.1} parent=59 // pred_fallthru
        _
    $region60: #{tpu_custom_call.1} parent=5 // pred_fallthru
      _
    %p1341 = scmp.le.s32.totalorder 2, %s16
    // Predicated region
    $region65: #{tpu_custom_call.1} parent=5 // pred_check
      %p1342 = pneg %p1341
    $region66: #{tpu_custom_call.1} parent=5 // pred_check_branch
      %1344 = sbr.rel (%p1342) target = $region68
    $region67: #{tpu_custom_call.1} parent=5 // pred_region
      %s1345 = ssub.s32 %s16, 2
      // Predicated region
      $region69: #{tpu_custom_call.1} parent=67 // pred_check
        %p1346 = pneg %p275
      $region70: #{tpu_custom_call.1} parent=67 // pred_check_branch
        %1348 = sbr.rel (%p1346) target = $region72
      $region71: #{tpu_custom_call.1} parent=67 // pred_region
        %s1349 = smul.u32 2, %s22
        %p1350 = scmp.lt.s32.totalorder %s1349, 3
        %s1351 = scalar_select %p1350, %s1349, 3
        %s1352 = smul.addr %s1351, 8
        %s1353 = scalar_lea.vmem %s10, %s1352
      $region72: #{tpu_custom_call.1} parent=67 // pred_fallthru
        _
    $region68: #{tpu_custom_call.1} parent=5 // pred_fallthru
      _
  $region6: #{tpu_custom_call.1} parent=0 // loop_footer
    %s20 = sadd.s32 1, %s16
  $region7: #{tpu_custom_call.1} parent=0 // loop_footer_branch
    %15 = sbr.rel target = $region3
  $region8: #{tpu_custom_call.1} parent=0 // loop_exit
    _

</llo_original>
